<compile_context>
chip_gen: v7x
topology: tpu7x:2x2x1
jax: 0.10.0
libtpu: 0.0.40
codegen_flags: <defaults>
</compile_context>

<pallas_src>
import functools

import jax
import jax.numpy as jnp
from jax import lax
from jax.experimental import pallas as pl
from jax.experimental.pallas import tpu as pltpu

BN_EPS = 1e-5


def _conv_bn_relu_kernel(x_ref, w_ref, mask_ref, gamma_ref, beta_ref, o_ref,
                         patch_ref, *, N, H, W, Cin, Cout, KH, KW, Wp, Cpad):
    """Fused Conv3x3 (same) + BatchNorm2d(train) + ReLU for the whole batch.

    x_ref:     (N, Cin, Hp*Wp)  zero-padded image, spatially flattened
    w_ref:     (Cout, KH*KW*Cpad) folded conv weights (zero rows in the Cin pad)
    mask_ref:  (1, L) 1.0 on valid flat columns, 0.0 on the Wp-W wrapped junk columns
    gamma_ref: (Cout, 1), beta_ref: (Cout, 1)
    o_ref:     (N, Cout, L) channel-major output (junk columns stripped by wrapper)
    patch_ref: (KH*KW*Cpad, L) im2col scratch, reused per image
    """
    L = o_ref.shape[-1]
    inv_m = 1.0 / float(N * H * W)

    # Zero once so the Cin->Cpad pad rows contribute nothing to the matmul.
    patch_ref[...] = jnp.zeros(patch_ref.shape, patch_ref.dtype)

    # --- conv: build the (K, L) patch per image and do ONE MXU matmul per image ---
    accs = []
    for n in range(N):
        for kh in range(KH):
            for kw in range(KW):
                t = kh * KW + kw
                d = kh * Wp + kw                       # flat shift of this tap
                # pure lane-offset slice: no (H,W)-merge relayout per tap
                patch_ref[t * Cpad:t * Cpad + Cin, :] = x_ref[n, :, d:d + L]
        accs.append(jnp.dot(w_ref[...], patch_ref[...],
                            preferred_element_type=jnp.float32))  # (Cout, L) f32

    # --- BatchNorm2d (train mode): batch stats over the N*H*W valid columns,
    #     two-pass centered variance (numerically safe) ---
    mask = mask_ref[...]                               # (1, L)
    mean = sum(jnp.sum(a * mask, axis=1, keepdims=True) for a in accs) * inv_m
    var = sum(jnp.sum(jnp.square((a - mean) * mask), axis=1, keepdims=True)
              for a in accs) * inv_m
    scale = gamma_ref[...] * lax.rsqrt(var + BN_EPS)   # (Cout, 1)
    shift = beta_ref[...] - mean * scale

    # --- folded FMA + ReLU, lane-dense channel-major stores (NCHW-direct) ---
    for n in range(N):
        o_ref[n] = jnp.maximum(accs[n] * scale + shift, 0.0).astype(o_ref.dtype)


def conv_block(x_nchw, w_oihw, bias, gamma, beta):
    """ConvBlock forward. x_nchw: (N, Cin, H, W) f32 -> (N, Cout, H, W) f32."""
    del bias  # cancelled exactly by the train-mode BN batch-mean subtraction
    N, Cin, H, W = x_nchw.shape
    Cout, _, KH, KW = w_oihw.shape
    Hp, Wp = H + KH - 1, W + KW - 1
    S = Hp * Wp
    L = (H - 1) * Wp + W                   # flat window length; (q % Wp) >= W is junk
    Cpad = ((Cin + 7) // 8) * 8            # per-tap Cin padded for aligned stores
    K = KH * KW * Cpad

    # --- glue (plain JAX, cheap): pad spatially + flatten; NO NHWC transpose ---
    x_flat = jnp.pad(x_nchw.astype(jnp.float32),
                     ((0, 0), (0, 0), (1, 1), (1, 1))).reshape(N, Cin, S)
    # weights -> (Cout, K) with K ordered (kh, kw, c_padded); pad entries are zero
    w_flat = jnp.pad(w_oihw.astype(jnp.float32),
                     ((0, 0), (0, Cpad - Cin), (0, 0), (0, 0)))
    w_flat = jnp.transpose(w_flat, (0, 2, 3, 1)).reshape(Cout, K)
    # validity mask over the L flat output columns
    mask = (jnp.arange(L, dtype=jnp.int32) % Wp < W).astype(jnp.float32).reshape(1, L)
    gamma_col = gamma.reshape(Cout, 1).astype(jnp.float32)
    beta_col = beta.reshape(Cout, 1).astype(jnp.float32)

    out_flat = pl.pallas_call(
        functools.partial(_conv_bn_relu_kernel, N=N, H=H, W=W, Cin=Cin, Cout=Cout,
                          KH=KH, KW=KW, Wp=Wp, Cpad=Cpad),
        out_shape=jax.ShapeDtypeStruct((N, Cout, L), jnp.float32),
        grid=(1,),
        in_specs=[
            pl.BlockSpec((N, Cin, S), lambda i: (0, 0, 0)),
            pl.BlockSpec((Cout, K), lambda i: (0, 0)),
            pl.BlockSpec((1, L), lambda i: (0, 0)),
            pl.BlockSpec((Cout, 1), lambda i: (0, 0)),
            pl.BlockSpec((Cout, 1), lambda i: (0, 0)),
        ],
        out_specs=pl.BlockSpec((N, Cout, L), lambda i: (0, 0, 0)),
        scratch_shapes=[pltpu.VMEM((K, L), jnp.float32)],
        compiler_params=pltpu.CompilerParams(
            dimension_semantics=("arbitrary",)),
    )(x_flat, w_flat, mask, gamma_col, beta_col)

    # strip the KW-1 junk columns per row: (N, Cout, L) -> (N, Cout, H, W)
    out = jnp.pad(out_flat, ((0, 0), (0, 0), (0, H * Wp - L)))
    return out.reshape(N, Cout, H, Wp)[..., :W]


def conv_block_reference(x_nchw, w_oihw, bias, gamma, beta):
    """Pure-JAX reference mirroring the PyTorch module in train() mode."""
    y = lax.conv_general_dilated(
        x_nchw, w_oihw, window_strides=(1, 1), padding=((1, 1), (1, 1)),
        dimension_numbers=("NCHW", "OIHW", "NCHW"),
    ) + bias[None, :, None, None]
    mean = jnp.mean(y, axis=(0, 2, 3), keepdims=True)
    var = jnp.mean(jnp.square(y - mean), axis=(0, 2, 3), keepdims=True)
    y = (y - mean) * lax.rsqrt(var + BN_EPS)
    y = y * gamma[None, :, None, None] + beta[None, :, None, None]
    return jnp.maximum(y, 0.0)


if __name__ == "__main__":
    N, Cin, H, W = 2, 17, 16, 16   # module defaults: in_channels=17, out_channels=32
    Cout = 32

    key = jax.random.PRNGKey(0)
    kx, kw, kb, kg, kbeta = jax.random.split(key, 5)

    x = jax.random.normal(kx, (N, Cin, H, W), dtype=jnp.float32)
    w = jax.random.normal(kw, (Cout, Cin, 3, 3), dtype=jnp.float32) * 0.1
    b = jax.random.normal(kb, (Cout,), dtype=jnp.float32) * 0.1
    gamma = 1.0 + 0.1 * jax.random.normal(kg, (Cout,), dtype=jnp.float32)
    beta = 0.1 * jax.random.normal(kbeta, (Cout,), dtype=jnp.float32)

    out = jax.block_until_ready(conv_block(x, w, b, gamma, beta))

    ref = jax.block_until_ready(conv_block_reference(x, w, b, gamma, beta))
    assert out.shape == (N, Cout, H, W)
    assert jnp.allclose(out, ref, rtol=1e-3, atol=1e-3), "mismatch vs reference"

    print("KERNEL_OK")
</pallas_src>

<mosaic_0001>
module attributes {stable_mosaic.version = 11 : i64} {
  func.func @_conv_bn_relu_kernel(%arg0: i32, %arg1: memref<2x17x324xf32, #tpu.memory_space<vmem>>, %arg2: memref<32x216xf32, #tpu.memory_space<vmem>>, %arg3: memref<1x286xf32, #tpu.memory_space<vmem>>, %arg4: memref<32x1xf32, #tpu.memory_space<vmem>>, %arg5: memref<32x1xf32, #tpu.memory_space<vmem>>, %arg6: memref<2x32x286xf32, #tpu.memory_space<vmem>>, %arg7: memref<216x286xf32, #tpu.memory_space<vmem>>) attributes {dimension_semantics = [#tpu.dimension_semantics<arbitrary>], iteration_bounds = array<i64: 1>, scalar_prefetch = 0 : i64, scratch_operands = 1 : i64, tpu.core_type = #tpu.core_type<tc>, window_params = [{pipeline_mode = #tpu.pipeline_mode<synchronous>, transform_indices = @transform_0, window_bounds = array<i64: 2, 17, 324>}, {pipeline_mode = #tpu.pipeline_mode<synchronous>, transform_indices = @transform_1, window_bounds = array<i64: 32, 216>}, {pipeline_mode = #tpu.pipeline_mode<synchronous>, transform_indices = @transform_2, window_bounds = array<i64: 1, 286>}, {pipeline_mode = #tpu.pipeline_mode<synchronous>, transform_indices = @transform_3, window_bounds = array<i64: 32, 1>}, {pipeline_mode = #tpu.pipeline_mode<synchronous>, transform_indices = @transform_4, window_bounds = array<i64: 32, 1>}, {pipeline_mode = #tpu.pipeline_mode<synchronous>, transform_indices = @transform_5, window_bounds = array<i64: 2, 32, 286>}]} {
    %cst = arith.constant 0.000000e+00 : f32
    %0 = vector.broadcast %cst : f32 to vector<216x286xf32>
    %c0 = arith.constant 0 : index
    %c0_0 = arith.constant 0 : index
    %1 = vector.load %arg7[%c0, %c0_0] : memref<216x286xf32, #tpu.memory_space<vmem>>, vector<216x286xf32>
    tpu.vector_store %arg7[%c0, %c0_0], %0 {strides = array<i32>} : memref<216x286xf32, #tpu.memory_space<vmem>>, vector<216x286xf32>,
    %c0_1 = arith.constant 0 : index
    %c0_2 = arith.constant 0 : index
    %c0_3 = arith.constant 0 : index
    %2 = vector.load %arg1[%c0_1, %c0_2, %c0_3] : memref<2x17x324xf32, #tpu.memory_space<vmem>>, vector<1x17x286xf32>
    %3 = vector.shape_cast %2 : vector<1x17x286xf32> to vector<17x286xf32>
    %c0_4 = arith.constant 0 : index
    %c0_5 = arith.constant 0 : index
    %4 = vector.load %arg7[%c0_4, %c0_5] : memref<216x286xf32, #tpu.memory_space<vmem>>, vector<17x286xf32>
    tpu.vector_store %arg7[%c0_4, %c0_5], %3 {strides = array<i32>} : memref<216x286xf32, #tpu.memory_space<vmem>>, vector<17x286xf32>,
    %c0_6 = arith.constant 0 : index
    %c0_7 = arith.constant 0 : index
    %c1 = arith.constant 1 : index
    %5 = vector.load %arg1[%c0_6, %c0_7, %c1] : memref<2x17x324xf32, #tpu.memory_space<vmem>>, vector<1x17x286xf32>
    %6 = vector.shape_cast %5 : vector<1x17x286xf32> to vector<17x286xf32>
    %c24 = arith.constant 24 : index
    %c0_8 = arith.constant 0 : index
    %7 = vector.load %arg7[%c24, %c0_8] : memref<216x286xf32, #tpu.memory_space<vmem>>, vector<17x286xf32>
    tpu.vector_store %arg7[%c24, %c0_8], %6 {strides = array<i32>} : memref<216x286xf32, #tpu.memory_space<vmem>>, vector<17x286xf32>,
    %c0_9 = arith.constant 0 : index
    %c0_10 = arith.constant 0 : index
    %c2 = arith.constant 2 : index
    %8 = vector.load %arg1[%c0_9, %c0_10, %c2] : memref<2x17x324xf32, #tpu.memory_space<vmem>>, vector<1x17x286xf32>
    %9 = vector.shape_cast %8 : vector<1x17x286xf32> to vector<17x286xf32>
    %c48 = arith.constant 48 : index
    %c0_11 = arith.constant 0 : index
    %10 = vector.load %arg7[%c48, %c0_11] : memref<216x286xf32, #tpu.memory_space<vmem>>, vector<17x286xf32>
    tpu.vector_store %arg7[%c48, %c0_11], %9 {strides = array<i32>} : memref<216x286xf32, #tpu.memory_space<vmem>>, vector<17x286xf32>,
    %c0_12 = arith.constant 0 : index
    %c0_13 = arith.constant 0 : index
    %c18 = arith.constant 18 : index
    %11 = vector.load %arg1[%c0_12, %c0_13, %c18] : memref<2x17x324xf32, #tpu.memory_space<vmem>>, vector<1x17x286xf32>
    %12 = vector.shape_cast %11 : vector<1x17x286xf32> to vector<17x286xf32>
    %c72 = arith.constant 72 : index
    %c0_14 = arith.constant 0 : index
    %13 = vector.load %arg7[%c72, %c0_14] : memref<216x286xf32, #tpu.memory_space<vmem>>, vector<17x286xf32>
    tpu.vector_store %arg7[%c72, %c0_14], %12 {strides = array<i32>} : memref<216x286xf32, #tpu.memory_space<vmem>>, vector<17x286xf32>,
    %c0_15 = arith.constant 0 : index
    %c0_16 = arith.constant 0 : index
    %c19 = arith.constant 19 : index
    %14 = vector.load %arg1[%c0_15, %c0_16, %c19] : memref<2x17x324xf32, #tpu.memory_space<vmem>>, vector<1x17x286xf32>
    %15 = vector.shape_cast %14 : vector<1x17x286xf32> to vector<17x286xf32>
    %c96 = arith.constant 96 : index
    %c0_17 = arith.constant 0 : index
    %16 = vector.load %arg7[%c96, %c0_17] : memref<216x286xf32, #tpu.memory_space<vmem>>, vector<17x286xf32>
    tpu.vector_store %arg7[%c96, %c0_17], %15 {strides = array<i32>} : memref<216x286xf32, #tpu.memory_space<vmem>>, vector<17x286xf32>,
    %c0_18 = arith.constant 0 : index
    %c0_19 = arith.constant 0 : index
    %c20 = arith.constant 20 : index
    %17 = vector.load %arg1[%c0_18, %c0_19, %c20] : memref<2x17x324xf32, #tpu.memory_space<vmem>>, vector<1x17x286xf32>
    %18 = vector.shape_cast %17 : vector<1x17x286xf32> to vector<17x286xf32>
    %c120 = arith.constant 120 : index
    %c0_20 = arith.constant 0 : index
    %19 = vector.load %arg7[%c120, %c0_20] : memref<216x286xf32, #tpu.memory_space<vmem>>, vector<17x286xf32>
    tpu.vector_store %arg7[%c120, %c0_20], %18 {strides = array<i32>} : memref<216x286xf32, #tpu.memory_space<vmem>>, vector<17x286xf32>,
    %c0_21 = arith.constant 0 : index
    %c0_22 = arith.constant 0 : index
    %c36 = arith.constant 36 : index
    %20 = vector.load %arg1[%c0_21, %c0_22, %c36] : memref<2x17x324xf32, #tpu.memory_space<vmem>>, vector<1x17x286xf32>
    %21 = vector.shape_cast %20 : vector<1x17x286xf32> to vector<17x286xf32>
    %c144 = arith.constant 144 : index
    %c0_23 = arith.constant 0 : index
    %22 = vector.load %arg7[%c144, %c0_23] : memref<216x286xf32, #tpu.memory_space<vmem>>, vector<17x286xf32>
    tpu.vector_store %arg7[%c144, %c0_23], %21 {strides = array<i32>} : memref<216x286xf32, #tpu.memory_space<vmem>>, vector<17x286xf32>,
    %c0_24 = arith.constant 0 : index
    %c0_25 = arith.constant 0 : index
    %c37 = arith.constant 37 : index
    %23 = vector.load %arg1[%c0_24, %c0_25, %c37] : memref<2x17x324xf32, #tpu.memory_space<vmem>>, vector<1x17x286xf32>
    %24 = vector.shape_cast %23 : vector<1x17x286xf32> to vector<17x286xf32>
    %c168 = arith.constant 168 : index
    %c0_26 = arith.constant 0 : index
    %25 = vector.load %arg7[%c168, %c0_26] : memref<216x286xf32, #tpu.memory_space<vmem>>, vector<17x286xf32>
    tpu.vector_store %arg7[%c168, %c0_26], %24 {strides = array<i32>} : memref<216x286xf32, #tpu.memory_space<vmem>>, vector<17x286xf32>,
    %c0_27 = arith.constant 0 : index
    %c0_28 = arith.constant 0 : index
    %c38 = arith.constant 38 : index
    %26 = vector.load %arg1[%c0_27, %c0_28, %c38] : memref<2x17x324xf32, #tpu.memory_space<vmem>>, vector<1x17x286xf32>
    %27 = vector.shape_cast %26 : vector<1x17x286xf32> to vector<17x286xf32>
    %c192 = arith.constant 192 : index
    %c0_29 = arith.constant 0 : index
    %28 = vector.load %arg7[%c192, %c0_29] : memref<216x286xf32, #tpu.memory_space<vmem>>, vector<17x286xf32>
    tpu.vector_store %arg7[%c192, %c0_29], %27 {strides = array<i32>} : memref<216x286xf32, #tpu.memory_space<vmem>>, vector<17x286xf32>,
    %c0_30 = arith.constant 0 : index
    %c0_31 = arith.constant 0 : index
    %29 = vector.load %arg2[%c0_30, %c0_31] : memref<32x216xf32, #tpu.memory_space<vmem>>, vector<32x216xf32>
    %c0_32 = arith.constant 0 : index
    %c0_33 = arith.constant 0 : index
    %30 = vector.load %arg7[%c0_32, %c0_33] : memref<216x286xf32, #tpu.memory_space<vmem>>, vector<216x286xf32>
    %cst_34 = arith.constant dense<0.000000e+00> : vector<32x286xf32>
    %31 = tpu.matmul %29, %30, %cst_34 {dimension_numbers = #tpu.dot_dimension_numbers<[1], [0], [0], [1], [0, 0, 1, 1], [], []>} : vector<32x216xf32>, vector<216x286xf32>, vector<32x286xf32> -> vector<32x286xf32>
    %c1_35 = arith.constant 1 : index
    %c0_36 = arith.constant 0 : index
    %c0_37 = arith.constant 0 : index
    %32 = vector.load %arg1[%c1_35, %c0_36, %c0_37] : memref<2x17x324xf32, #tpu.memory_space<vmem>>, vector<1x17x286xf32>
    %33 = vector.shape_cast %32 : vector<1x17x286xf32> to vector<17x286xf32>
    %c0_38 = arith.constant 0 : index
    %c0_39 = arith.constant 0 : index
    %34 = vector.load %arg7[%c0_38, %c0_39] : memref<216x286xf32, #tpu.memory_space<vmem>>, vector<17x286xf32>
    tpu.vector_store %arg7[%c0_38, %c0_39], %33 {strides = array<i32>} : memref<216x286xf32, #tpu.memory_space<vmem>>, vector<17x286xf32>,
    %c1_40 = arith.constant 1 : index
    %c0_41 = arith.constant 0 : index
    %c1_42 = arith.constant 1 : index
    %35 = vector.load %arg1[%c1_40, %c0_41, %c1_42] : memref<2x17x324xf32, #tpu.memory_space<vmem>>, vector<1x17x286xf32>
    %36 = vector.shape_cast %35 : vector<1x17x286xf32> to vector<17x286xf32>
    %c24_43 = arith.constant 24 : index
    %c0_44 = arith.constant 0 : index
    %37 = vector.load %arg7[%c24_43, %c0_44] : memref<216x286xf32, #tpu.memory_space<vmem>>, vector<17x286xf32>
    tpu.vector_store %arg7[%c24_43, %c0_44], %36 {strides = array<i32>} : memref<216x286xf32, #tpu.memory_space<vmem>>, vector<17x286xf32>,
    %c1_45 = arith.constant 1 : index
    %c0_46 = arith.constant 0 : index
    %c2_47 = arith.constant 2 : index
    %38 = vector.load %arg1[%c1_45, %c0_46, %c2_47] : memref<2x17x324xf32, #tpu.memory_space<vmem>>, vector<1x17x286xf32>
    %39 = vector.shape_cast %38 : vector<1x17x286xf32> to vector<17x286xf32>
    %c48_48 = arith.constant 48 : index
    %c0_49 = arith.constant 0 : index
    %40 = vector.load %arg7[%c48_48, %c0_49] : memref<216x286xf32, #tpu.memory_space<vmem>>, vector<17x286xf32>
    tpu.vector_store %arg7[%c48_48, %c0_49], %39 {strides = array<i32>} : memref<216x286xf32, #tpu.memory_space<vmem>>, vector<17x286xf32>,
    %c1_50 = arith.constant 1 : index
    %c0_51 = arith.constant 0 : index
    %c18_52 = arith.constant 18 : index
    %41 = vector.load %arg1[%c1_50, %c0_51, %c18_52] : memref<2x17x324xf32, #tpu.memory_space<vmem>>, vector<1x17x286xf32>
    %42 = vector.shape_cast %41 : vector<1x17x286xf32> to vector<17x286xf32>
    %c72_53 = arith.constant 72 : index
    %c0_54 = arith.constant 0 : index
    %43 = vector.load %arg7[%c72_53, %c0_54] : memref<216x286xf32, #tpu.memory_space<vmem>>, vector<17x286xf32>
    tpu.vector_store %arg7[%c72_53, %c0_54], %42 {strides = array<i32>} : memref<216x286xf32, #tpu.memory_space<vmem>>, vector<17x286xf32>,
    %c1_55 = arith.constant 1 : index
    %c0_56 = arith.constant 0 : index
    %c19_57 = arith.constant 19 : index
    %44 = vector.load %arg1[%c1_55, %c0_56, %c19_57] : memref<2x17x324xf32, #tpu.memory_space<vmem>>, vector<1x17x286xf32>
    %45 = vector.shape_cast %44 : vector<1x17x286xf32> to vector<17x286xf32>
    %c96_58 = arith.constant 96 : index
    %c0_59 = arith.constant 0 : index
    %46 = vector.load %arg7[%c96_58, %c0_59] : memref<216x286xf32, #tpu.memory_space<vmem>>, vector<17x286xf32>
    tpu.vector_store %arg7[%c96_58, %c0_59], %45 {strides = array<i32>} : memref<216x286xf32, #tpu.memory_space<vmem>>, vector<17x286xf32>,
    %c1_60 = arith.constant 1 : index
    %c0_61 = arith.constant 0 : index
    %c20_62 = arith.constant 20 : index
    %47 = vector.load %arg1[%c1_60, %c0_61, %c20_62] : memref<2x17x324xf32, #tpu.memory_space<vmem>>, vector<1x17x286xf32>
    %48 = vector.shape_cast %47 : vector<1x17x286xf32> to vector<17x286xf32>
    %c120_63 = arith.constant 120 : index
    %c0_64 = arith.constant 0 : index
    %49 = vector.load %arg7[%c120_63, %c0_64] : memref<216x286xf32, #tpu.memory_space<vmem>>, vector<17x286xf32>
    tpu.vector_store %arg7[%c120_63, %c0_64], %48 {strides = array<i32>} : memref<216x286xf32, #tpu.memory_space<vmem>>, vector<17x286xf32>,
    %c1_65 = arith.constant 1 : index
    %c0_66 = arith.constant 0 : index
    %c36_67 = arith.constant 36 : index
    %50 = vector.load %arg1[%c1_65, %c0_66, %c36_67] : memref<2x17x324xf32, #tpu.memory_space<vmem>>, vector<1x17x286xf32>
    %51 = vector.shape_cast %50 : vector<1x17x286xf32> to vector<17x286xf32>
    %c144_68 = arith.constant 144 : index
    %c0_69 = arith.constant 0 : index
    %52 = vector.load %arg7[%c144_68, %c0_69] : memref<216x286xf32, #tpu.memory_space<vmem>>, vector<17x286xf32>
    tpu.vector_store %arg7[%c144_68, %c0_69], %51 {strides = array<i32>} : memref<216x286xf32, #tpu.memory_space<vmem>>, vector<17x286xf32>,
    %c1_70 = arith.constant 1 : index
    %c0_71 = arith.constant 0 : index
    %c37_72 = arith.constant 37 : index
    %53 = vector.load %arg1[%c1_70, %c0_71, %c37_72] : memref<2x17x324xf32, #tpu.memory_space<vmem>>, vector<1x17x286xf32>
    %54 = vector.shape_cast %53 : vector<1x17x286xf32> to vector<17x286xf32>
    %c168_73 = arith.constant 168 : index
    %c0_74 = arith.constant 0 : index
    %55 = vector.load %arg7[%c168_73, %c0_74] : memref<216x286xf32, #tpu.memory_space<vmem>>, vector<17x286xf32>
    tpu.vector_store %arg7[%c168_73, %c0_74], %54 {strides = array<i32>} : memref<216x286xf32, #tpu.memory_space<vmem>>, vector<17x286xf32>,
    %c1_75 = arith.constant 1 : index
    %c0_76 = arith.constant 0 : index
    %c38_77 = arith.constant 38 : index
    %56 = vector.load %arg1[%c1_75, %c0_76, %c38_77] : memref<2x17x324xf32, #tpu.memory_space<vmem>>, vector<1x17x286xf32>
    %57 = vector.shape_cast %56 : vector<1x17x286xf32> to vector<17x286xf32>
    %c192_78 = arith.constant 192 : index
    %c0_79 = arith.constant 0 : index
    %58 = vector.load %arg7[%c192_78, %c0_79] : memref<216x286xf32, #tpu.memory_space<vmem>>, vector<17x286xf32>
    tpu.vector_store %arg7[%c192_78, %c0_79], %57 {strides = array<i32>} : memref<216x286xf32, #tpu.memory_space<vmem>>, vector<17x286xf32>,
    %c0_80 = arith.constant 0 : index
    %c0_81 = arith.constant 0 : index
    %59 = vector.load %arg2[%c0_80, %c0_81] : memref<32x216xf32, #tpu.memory_space<vmem>>, vector<32x216xf32>
    %c0_82 = arith.constant 0 : index
    %c0_83 = arith.constant 0 : index
    %60 = vector.load %arg7[%c0_82, %c0_83] : memref<216x286xf32, #tpu.memory_space<vmem>>, vector<216x286xf32>
    %cst_84 = arith.constant dense<0.000000e+00> : vector<32x286xf32>
    %61 = tpu.matmul %59, %60, %cst_84 {dimension_numbers = #tpu.dot_dimension_numbers<[1], [0], [0], [1], [0, 0, 1, 1], [], []>} : vector<32x216xf32>, vector<216x286xf32>, vector<32x286xf32> -> vector<32x286xf32>
    %c0_85 = arith.constant 0 : index
    %c0_86 = arith.constant 0 : index
    %62 = vector.load %arg3[%c0_85, %c0_86] : memref<1x286xf32, #tpu.memory_space<vmem>>, vector<1x286xf32>
    %63 = vector.broadcast %62 : vector<1x286xf32> to vector<32x286xf32>
    %64 = arith.mulf %31, %63 : vector<32x286xf32>
    %cst_87 = arith.constant dense<0.000000e+00> : vector<32xf32>
    %65 = vector.multi_reduction <add>, %64, %cst_87 [1] : vector<32x286xf32> to vector<32xf32>
    %66 = vector.shape_cast %65 : vector<32xf32> to vector<32x1xf32>
    %cst_88 = arith.constant 0.000000e+00 : f32
    %67 = vector.broadcast %cst_88 : f32 to vector<32x1xf32>
    %68 = arith.addf %67, %66 : vector<32x1xf32>
    %69 = vector.broadcast %62 : vector<1x286xf32> to vector<32x286xf32>
    %70 = arith.mulf %61, %69 : vector<32x286xf32>
    %cst_89 = arith.constant dense<0.000000e+00> : vector<32xf32>
    %71 = vector.multi_reduction <add>, %70, %cst_89 [1] : vector<32x286xf32> to vector<32xf32>
    %72 = vector.shape_cast %71 : vector<32xf32> to vector<32x1xf32>
    %73 = arith.addf %68, %72 : vector<32x1xf32>
    %cst_90 = arith.constant 0.001953125 : f32
    %74 = vector.broadcast %cst_90 : f32 to vector<32x1xf32>
    %75 = arith.mulf %73, %74 : vector<32x1xf32>
    %76 = vector.broadcast %75 : vector<32x1xf32> to vector<32x286xf32>
    %77 = arith.subf %31, %76 : vector<32x286xf32>
    %78 = vector.broadcast %62 : vector<1x286xf32> to vector<32x286xf32>
    %79 = arith.mulf %77, %78 : vector<32x286xf32>
    %80 = arith.mulf %79, %79 : vector<32x286xf32>
    %cst_91 = arith.constant dense<0.000000e+00> : vector<32xf32>
    %81 = vector.multi_reduction <add>, %80, %cst_91 [1] : vector<32x286xf32> to vector<32xf32>
    %82 = vector.shape_cast %81 : vector<32xf32> to vector<32x1xf32>
    %cst_92 = arith.constant 0.000000e+00 : f32
    %83 = vector.broadcast %cst_92 : f32 to vector<32x1xf32>
    %84 = arith.addf %83, %82 : vector<32x1xf32>
    %85 = vector.broadcast %75 : vector<32x1xf32> to vector<32x286xf32>
    %86 = arith.subf %61, %85 : vector<32x286xf32>
    %87 = vector.broadcast %62 : vector<1x286xf32> to vector<32x286xf32>
    %88 = arith.mulf %86, %87 : vector<32x286xf32>
    %89 = arith.mulf %88, %88 : vector<32x286xf32>
    %cst_93 = arith.constant dense<0.000000e+00> : vector<32xf32>
    %90 = vector.multi_reduction <add>, %89, %cst_93 [1] : vector<32x286xf32> to vector<32xf32>
    %91 = vector.shape_cast %90 : vector<32xf32> to vector<32x1xf32>
    %92 = arith.addf %84, %91 : vector<32x1xf32>
    %cst_94 = arith.constant 0.001953125 : f32
    %93 = vector.broadcast %cst_94 : f32 to vector<32x1xf32>
    %94 = arith.mulf %92, %93 : vector<32x1xf32>
    %c0_95 = arith.constant 0 : index
    %c0_96 = arith.constant 0 : index
    %95 = vector.load %arg4[%c0_95, %c0_96] : memref<32x1xf32, #tpu.memory_space<vmem>>, vector<32x1xf32>
    %cst_97 = arith.constant 9.99999974E-6 : f32
    %96 = vector.broadcast %cst_97 : f32 to vector<32x1xf32>
    %97 = arith.addf %94, %96 : vector<32x1xf32>
    %98 = math.rsqrt %97 : vector<32x1xf32>
    %99 = arith.mulf %95, %98 : vector<32x1xf32>
    %c0_98 = arith.constant 0 : index
    %c0_99 = arith.constant 0 : index
    %100 = vector.load %arg5[%c0_98, %c0_99] : memref<32x1xf32, #tpu.memory_space<vmem>>, vector<32x1xf32>
    %101 = arith.mulf %75, %99 : vector<32x1xf32>
    %102 = arith.subf %100, %101 : vector<32x1xf32>
    %103 = vector.broadcast %99 : vector<32x1xf32> to vector<32x286xf32>
    %104 = arith.mulf %31, %103 : vector<32x286xf32>
    %105 = vector.broadcast %102 : vector<32x1xf32> to vector<32x286xf32>
    %106 = arith.addf %104, %105 : vector<32x286xf32>
    %cst_100 = arith.constant 0.000000e+00 : f32
    %107 = vector.broadcast %cst_100 : f32 to vector<32x286xf32>
    %108 = arith.maximumf %106, %107 : vector<32x286xf32>
    %c0_101 = arith.constant 0 : index
    %c0_102 = arith.constant 0 : index
    %c0_103 = arith.constant 0 : index
    %109 = vector.load %arg6[%c0_101, %c0_102, %c0_103] : memref<2x32x286xf32, #tpu.memory_space<vmem>>, vector<1x32x286xf32>
    %110 = vector.shape_cast %109 : vector<1x32x286xf32> to vector<32x286xf32>
    %111 = vector.shape_cast %108 : vector<32x286xf32> to vector<1x32x286xf32>
    tpu.vector_store %arg6[%c0_101, %c0_102, %c0_103], %111 {strides = array<i32>} : memref<2x32x286xf32, #tpu.memory_space<vmem>>, vector<1x32x286xf32>,
    %112 = vector.broadcast %99 : vector<32x1xf32> to vector<32x286xf32>
    %113 = arith.mulf %61, %112 : vector<32x286xf32>
    %114 = vector.broadcast %102 : vector<32x1xf32> to vector<32x286xf32>
    %115 = arith.addf %113, %114 : vector<32x286xf32>
    %cst_104 = arith.constant 0.000000e+00 : f32
    %116 = vector.broadcast %cst_104 : f32 to vector<32x286xf32>
    %117 = arith.maximumf %115, %116 : vector<32x286xf32>
    %c1_105 = arith.constant 1 : index
    %c0_106 = arith.constant 0 : index
    %c0_107 = arith.constant 0 : index
    %118 = vector.load %arg6[%c1_105, %c0_106, %c0_107] : memref<2x32x286xf32, #tpu.memory_space<vmem>>, vector<1x32x286xf32>
    %119 = vector.shape_cast %118 : vector<1x32x286xf32> to vector<32x286xf32>
    %120 = vector.shape_cast %117 : vector<32x286xf32> to vector<1x32x286xf32>
    tpu.vector_store %arg6[%c1_105, %c0_106, %c0_107], %120 {strides = array<i32>} : memref<2x32x286xf32, #tpu.memory_space<vmem>>, vector<1x32x286xf32>,
    return
  }
  func.func @transform_0(%arg0: i32) -> (i32, i32, i32) {
    %c0_i32 = arith.constant 0 : i32
    %c0_i32_0 = arith.constant 0 : i32
    %c0_i32_1 = arith.constant 0 : i32
    %c0_i32_2 = arith.constant 0 : i32
    return %c0_i32, %c0_i32_0, %c0_i32_1 : i32, i32, i32
  }
  func.func @transform_1(%arg0: i32) -> (i32, i32) {
    %c0_i32 = arith.constant 0 : i32
    %c0_i32_0 = arith.constant 0 : i32
    %c0_i32_1 = arith.constant 0 : i32
    return %c0_i32, %c0_i32_0 : i32, i32
  }
  func.func @transform_2(%arg0: i32) -> (i32, i32) {
    %c0_i32 = arith.constant 0 : i32
    %c0_i32_0 = arith.constant 0 : i32
    %c0_i32_1 = arith.constant 0 : i32
    return %c0_i32, %c0_i32_0 : i32, i32
  }
  func.func @transform_3(%arg0: i32) -> (i32, i32) {
    %c0_i32 = arith.constant 0 : i32
    %c0_i32_0 = arith.constant 0 : i32
    %c0_i32_1 = arith.constant 0 : i32
    return %c0_i32, %c0_i32_0 : i32, i32
  }
  func.func @transform_4(%arg0: i32) -> (i32, i32) {
    %c0_i32 = arith.constant 0 : i32
    %c0_i32_0 = arith.constant 0 : i32
    %c0_i32_1 = arith.constant 0 : i32
    return %c0_i32, %c0_i32_0 : i32, i32
  }
  func.func @transform_5(%arg0: i32) -> (i32, i32, i32) {
    %c0_i32 = arith.constant 0 : i32
    %c0_i32_0 = arith.constant 0 : i32
    %c0_i32_1 = arith.constant 0 : i32
    %c0_i32_2 = arith.constant 0 : i32
    return %c0_i32, %c0_i32_0, %c0_i32_1 : i32, i32, i32
  }
}

</mosaic_0001>

<llo_original>
// kernel: tpu_custom_call.1
$region0: #{tpu_custom_call.1}
  #allocation0 [shape = 'u32[]', space=smem, size = 0x4, offset = 0x4, fixed_abs, tag = 'smem constant byte address 0x4 - core index']
  #allocation1 [shape = 'u32[144,128]{1,0:T(1,128)}', space=vmem, size = 0x12000, scoped, tag = 'internal scratch']
  #allocation2 [shape = 'f32[216,286]{1,0:T(8,128)}', space=vmem, size = 0x51000, scoped, tag = 'scratch operand']
  %s0 = inlined_call_operand.vmem [shape: f32[2,17,324], index: 0, kind: input, shape index: {}]
  %s1 = inlined_call_operand.vmem [shape: f32[32,216], index: 1, kind: input, shape index: {}]
  %s2 = inlined_call_operand.vmem [shape: f32[1,286], index: 2, kind: input, shape index: {}]
  %s3 = inlined_call_operand.vmem [shape: f32[32,1], index: 3, kind: input, shape index: {}]
  %s4 = inlined_call_operand.vmem [shape: f32[32,1], index: 4, kind: input, shape index: {}]
  %s5 = inlined_call_operand.hbm [shape: f32[2,32,286], index: 5, kind: output, shape index: {}]
  %s6 = sld [smem:[#allocation0]]
  $region30: #{tpu_custom_call.1} parent=0
    _
  %s8 = ssub.s32 1, %s6
  %s9 = scalar_select 0, %s8, %s6
  $region1: #{tpu_custom_call.1} parent=0
    #allocation3 [shape = 'u8[98304]{0}', space=vmem, size = 0x18000, scoped, tag = 'output window, operand 0, single buffered']
    #allocation4 [shape = 's32[1]{0}', space=sflag, size = 0x4, scoped, tag = 'scoped memory for tpu_custom_call.1']
    %10 = vsyncpa [#allocation4], 0
    // Predicated region
    $region2: #{tpu_custom_call.1} parent=1 // pred_check
      _
    $region3: #{tpu_custom_call.1} parent=1 // pred_check_branch
      %12 = sbr.rel (0) target = $region5
    $region4: #{tpu_custom_call.1} parent=1 // pred_region
      _
    $region5: #{tpu_custom_call.1} parent=1 // pred_fallthru
      _
    // Predicated region
    $region6: #{tpu_custom_call.1} parent=1 // pred_check
      _
    $region7: #{tpu_custom_call.1} parent=1 // pred_check_branch
      %14 = sbr.rel (0) target = $region9
    $region8: #{tpu_custom_call.1} parent=1 // pred_region
      _
    $region9: #{tpu_custom_call.1} parent=1 // pred_fallthru
      _
    // Predicated region
    $region10: #{tpu_custom_call.1} parent=1 // pred_check
      _
    $region11: #{tpu_custom_call.1} parent=1 // pred_check_branch
      %16 = sbr.rel (0) target = $region13
    $region12: #{tpu_custom_call.1} parent=1 // pred_region
      _
    $region13: #{tpu_custom_call.1} parent=1 // pred_fallthru
      _
    // Predicated region
    $region14: #{tpu_custom_call.1} parent=1 // pred_check
      _
    $region15: #{tpu_custom_call.1} parent=1 // pred_check_branch
      %18 = sbr.rel (0) target = $region17
    $region16: #{tpu_custom_call.1} parent=1 // pred_region
      _
    $region17: #{tpu_custom_call.1} parent=1 // pred_fallthru
      _
    // Predicated region
    $region18: #{tpu_custom_call.1} parent=1 // pred_check
      _
    $region19: #{tpu_custom_call.1} parent=1 // pred_check_branch
      %20 = sbr.rel (0) target = $region21
    $region20: #{tpu_custom_call.1} parent=1 // pred_region
      _
    $region21: #{tpu_custom_call.1} parent=1 // pred_fallthru
      _
    %21 = vst [vmem:[#allocation2] sm:$0xff] 0.0
    %22 = vst [vmem:[#allocation2 + $0x8] sm:$0xff] 0.0
    %vm23 = vcmask 244736
    %24 = vst.msk [vmem:[#allocation2 + $0x10] sm:$0xff] %vm23, 0.0
    %25 = vst [vmem:[#allocation2 + $0x18] sm:$0xff] 0.0
    %26 = vst [vmem:[#allocation2 + $0x20] sm:$0xff] 0.0
    %27 = vst.msk [vmem:[#allocation2 + $0x28] sm:$0xff] %vm23, 0.0
    %28 = vst [vmem:[#allocation2 + $0x30] sm:$0xff] 0.0
    %29 = vst [vmem:[#allocation2 + $0x38] sm:$0xff] 0.0
    %30 = vst.msk [vmem:[#allocation2 + $0x40] sm:$0xff] %vm23, 0.0
    %31 = vst [vmem:[#allocation2 + $0x48] sm:$0xff] 0.0
    %32 = vst [vmem:[#allocation2 + $0x50] sm:$0xff] 0.0
    %33 = vst.msk [vmem:[#allocation2 + $0x58] sm:$0xff] %vm23, 0.0
    %34 = vst [vmem:[#allocation2 + $0x60] sm:$0xff] 0.0
    %35 = vst [vmem:[#allocation2 + $0x68] sm:$0xff] 0.0
    %36 = vst.msk [vmem:[#allocation2 + $0x70] sm:$0xff] %vm23, 0.0
    %37 = vst [vmem:[#allocation2 + $0x78] sm:$0xff] 0.0
    %38 = vst [vmem:[#allocation2 + $0x80] sm:$0xff] 0.0
    %39 = vst.msk [vmem:[#allocation2 + $0x88] sm:$0xff] %vm23, 0.0
    %40 = vst [vmem:[#allocation2 + $0x90] sm:$0xff] 0.0
    %41 = vst [vmem:[#allocation2 + $0x98] sm:$0xff] 0.0
    %42 = vst.msk [vmem:[#allocation2 + $0xa0] sm:$0xff] %vm23, 0.0
    %43 = vst [vmem:[#allocation2 + $0xa8] sm:$0xff] 0.0
    %44 = vst [vmem:[#allocation2 + $0xb0] sm:$0xff] 0.0
    %45 = vst.msk [vmem:[#allocation2 + $0xb8] sm:$0xff] %vm23, 0.0
    %46 = vst [vmem:[#allocation2 + $0xc0] sm:$0xff] 0.0
    %47 = vst [vmem:[#allocation2 + $0xc8] sm:$0xff] 0.0
    %48 = vst.msk [vmem:[#allocation2 + $0xd0] sm:$0xff] %vm23, 0.0
    %49 = vst [vmem:[#allocation2 + $0xd8] sm:$0xff] 0.0
    %50 = vst [vmem:[#allocation2 + $0xe0] sm:$0xff] 0.0
    %51 = vst.msk [vmem:[#allocation2 + $0xe8] sm:$0xff] %vm23, 0.0
    %52 = vst [vmem:[#allocation2 + $0xf0] sm:$0xff] 0.0
    %53 = vst [vmem:[#allocation2 + $0xf8] sm:$0xff] 0.0
    %54 = vst.msk [vmem:[#allocation2 + $0x100] sm:$0xff] %vm23, 0.0
    %55 = vst [vmem:[#allocation2 + $0x108] sm:$0xff] 0.0
    %56 = vst [vmem:[#allocation2 + $0x110] sm:$0xff] 0.0
    %57 = vst.msk [vmem:[#allocation2 + $0x118] sm:$0xff] %vm23, 0.0
    %58 = vst [vmem:[#allocation2 + $0x120] sm:$0xff] 0.0
    %59 = vst [vmem:[#allocation2 + $0x128] sm:$0xff] 0.0
    %60 = vst.msk [vmem:[#allocation2 + $0x130] sm:$0xff] %vm23, 0.0
    %61 = vst [vmem:[#allocation2 + $0x138] sm:$0xff] 0.0
    %62 = vst [vmem:[#allocation2 + $0x140] sm:$0xff] 0.0
    %63 = vst.msk [vmem:[#allocation2 + $0x148] sm:$0xff] %vm23, 0.0
    %64 = vst [vmem:[#allocation2 + $0x150] sm:$0xff] 0.0
    %65 = vst [vmem:[#allocation2 + $0x158] sm:$0xff] 0.0
    %66 = vst.msk [vmem:[#allocation2 + $0x160] sm:$0xff] %vm23, 0.0
    %67 = vst [vmem:[#allocation2 + $0x168] sm:$0xff] 0.0
    %68 = vst [vmem:[#allocation2 + $0x170] sm:$0xff] 0.0
    %69 = vst.msk [vmem:[#allocation2 + $0x178] sm:$0xff] %vm23, 0.0
    %70 = vst [vmem:[#allocation2 + $0x180] sm:$0xff] 0.0
    %71 = vst [vmem:[#allocation2 + $0x188] sm:$0xff] 0.0
    %72 = vst.msk [vmem:[#allocation2 + $0x190] sm:$0xff] %vm23, 0.0
    %73 = vst [vmem:[#allocation2 + $0x198] sm:$0xff] 0.0
    %74 = vst [vmem:[#allocation2 + $0x1a0] sm:$0xff] 0.0
    %75 = vst.msk [vmem:[#allocation2 + $0x1a8] sm:$0xff] %vm23, 0.0
    %76 = vst [vmem:[#allocation2 + $0x1b0] sm:$0xff] 0.0
    %77 = vst [vmem:[#allocation2 + $0x1b8] sm:$0xff] 0.0
    %78 = vst.msk [vmem:[#allocation2 + $0x1c0] sm:$0xff] %vm23, 0.0
    %79 = vst [vmem:[#allocation2 + $0x1c8] sm:$0xff] 0.0
    %80 = vst [vmem:[#allocation2 + $0x1d0] sm:$0xff] 0.0
    %81 = vst.msk [vmem:[#allocation2 + $0x1d8] sm:$0xff] %vm23, 0.0
    %82 = vst [vmem:[#allocation2 + $0x1e0] sm:$0xff] 0.0
    %83 = vst [vmem:[#allocation2 + $0x1e8] sm:$0xff] 0.0
    %84 = vst.msk [vmem:[#allocation2 + $0x1f0] sm:$0xff] %vm23, 0.0
    %85 = vst [vmem:[#allocation2 + $0x1f8] sm:$0xff] 0.0
    %86 = vst [vmem:[#allocation2 + $0x200] sm:$0xff] 0.0
    %87 = vst.msk [vmem:[#allocation2 + $0x208] sm:$0xff] %vm23, 0.0
    %88 = vst [vmem:[#allocation2 + $0x210] sm:$0xff] 0.0
    %89 = vst [vmem:[#allocation2 + $0x218] sm:$0xff] 0.0
    %90 = vst.msk [vmem:[#allocation2 + $0x220] sm:$0xff] %vm23, 0.0
    %91 = vst [vmem:[#allocation2 + $0x228] sm:$0xff] 0.0
    %92 = vst [vmem:[#allocation2 + $0x230] sm:$0xff] 0.0
    %93 = vst.msk [vmem:[#allocation2 + $0x238] sm:$0xff] %vm23, 0.0
    %94 = vst [vmem:[#allocation2 + $0x240] sm:$0xff] 0.0
    %95 = vst [vmem:[#allocation2 + $0x248] sm:$0xff] 0.0
    %96 = vst.msk [vmem:[#allocation2 + $0x250] sm:$0xff] %vm23, 0.0
    %97 = vst [vmem:[#allocation2 + $0x258] sm:$0xff] 0.0
    %98 = vst [vmem:[#allocation2 + $0x260] sm:$0xff] 0.0
    %99 = vst.msk [vmem:[#allocation2 + $0x268] sm:$0xff] %vm23, 0.0
    %100 = vst [vmem:[#allocation2 + $0x270] sm:$0xff] 0.0
    %101 = vst [vmem:[#allocation2 + $0x278] sm:$0xff] 0.0
    %102 = vst.msk [vmem:[#allocation2 + $0x280] sm:$0xff] %vm23, 0.0
    %v103 = vld [vmem:[%s0] sm:$0xff]
    %v104 = vld [vmem:[%s0 + $0x8] sm:$0xff]
    %v105 = vld [vmem:[%s0 + $0x10] sm:$0xff]
    %v106 = vld [vmem:[%s0 + $0x18] sm:$0xff]
    %v107 = vld [vmem:[%s0 + $0x20] sm:$0xff]
    %v108 = vld [vmem:[%s0 + $0x28] sm:$0xff]
    %v109 = vld [vmem:[%s0 + $0x30] sm:$0x1]
    %v110 = vld [vmem:[%s0 + $0x38] sm:$0x1]
    %v111 = vld [vmem:[%s0 + $0x40] sm:$0x1]
    %112 = vst [vmem:[#allocation2] sm:$0xff] %v103
    %113 = vst [vmem:[#allocation2 + $0x8] sm:$0xff] %v104
    %114 = vst.msk [vmem:[#allocation2 + $0x10] sm:$0xff] %vm23, %v105
    %115 = vst [vmem:[#allocation2 + $0x18] sm:$0xff] %v106
    %116 = vst [vmem:[#allocation2 + $0x20] sm:$0xff] %v107
    %117 = vst.msk [vmem:[#allocation2 + $0x28] sm:$0xff] %vm23, %v108
    %118 = vst [vmem:[#allocation2 + $0x30] sm:$0x1] %v109
    %119 = vst [vmem:[#allocation2 + $0x38] sm:$0x1] %v110
    %vm120 = vcmask 237568
    %121 = vst.msk [vmem:[#allocation2 + $0x40] sm:$0x1] %vm120, %v111
    %v122 = vld [vmem:[%s0] sm:$0xff]
    %v123 = vld [vmem:[%s0 + $0x8] sm:$0xff]
    %v124 = vld [vmem:[%s0 + $0x10] sm:$0xff]
    %v125 = vld [vmem:[%s0 + $0x18] sm:$0xff]
    %v126 = vld [vmem:[%s0 + $0x20] sm:$0xff]
    %v127 = vld [vmem:[%s0 + $0x28] sm:$0xff]
    %v128 = vld [vmem:[%s0 + $0x30] sm:$0x1]
    %v129 = vld [vmem:[%s0 + $0x38] sm:$0x1]
    %v130 = vld [vmem:[%s0 + $0x40] sm:$0x1]
    %140 = vrot.lane.b32.xlu0 %v122, 127
    %v141 = vpop.permute.xlu0 %140
    %142 = vrot.lane.b32.xlu0 %v123, 127
    %v143 = vpop.permute.xlu0 %142
    %144 = vrot.lane.b32.xlu0 %v124, 127
    %v145 = vpop.permute.xlu0 %144
    %146 = vrot.lane.b32.xlu0 %v125, 127
    %v147 = vpop.permute.xlu0 %146
    %148 = vrot.lane.b32.xlu0 %v126, 127
    %v149 = vpop.permute.xlu0 %148
    %150 = vrot.lane.b32.xlu0 %v127, 127
    %v151 = vpop.permute.xlu0 %150
    %152 = vrot.lane.b32.xlu0 %v128, 127
    %v153 = vpop.permute.xlu0 %152
    %154 = vrot.lane.b32.xlu0 %v129, 127
    %v155 = vpop.permute.xlu0 %154
    %156 = vrot.lane.b32.xlu0 %v130, 127
    %v157 = vpop.permute.xlu0 %156
    %vm158 = vcmask 1039360
    %v159 = vsel %vm158, %v141, %v143
    %v160 = vsel %vm158, %v143, %v145
    %v161 = vsel %vm158, %v147, %v149
    %v162 = vsel %vm158, %v149, %v151
    %v163 = vsel %vm158, %v153, %v155
    %v164 = vsel %vm158, %v155, %v157
    %174 = vst [vmem:[#allocation2 + $0x48] sm:$0xff] %v159
    %175 = vst [vmem:[#allocation2 + $0x50] sm:$0xff] %v160
    %176 = vst.msk [vmem:[#allocation2 + $0x58] sm:$0xff] %vm23, %v145
    %177 = vst [vmem:[#allocation2 + $0x60] sm:$0xff] %v161
    %178 = vst [vmem:[#allocation2 + $0x68] sm:$0xff] %v162
    %179 = vst.msk [vmem:[#allocation2 + $0x70] sm:$0xff] %vm23, %v151
    %180 = vst [vmem:[#allocation2 + $0x78] sm:$0x1] %v163
    %181 = vst [vmem:[#allocation2 + $0x80] sm:$0x1] %v164
    %182 = vst.msk [vmem:[#allocation2 + $0x88] sm:$0x1] %vm120, %v157
    %v183 = vld [vmem:[%s0] sm:$0xff]
    %v184 = vld [vmem:[%s0 + $0x8] sm:$0xff]
    %v185 = vld [vmem:[%s0 + $0x10] sm:$0xff]
    %v186 = vld [vmem:[%s0 + $0x18] sm:$0xff]
    %v187 = vld [vmem:[%s0 + $0x20] sm:$0xff]
    %v188 = vld [vmem:[%s0 + $0x28] sm:$0xff]
    %v189 = vld [vmem:[%s0 + $0x30] sm:$0x1]
    %v190 = vld [vmem:[%s0 + $0x38] sm:$0x1]
    %v191 = vld [vmem:[%s0 + $0x40] sm:$0x1]
    %201 = vrot.lane.b32.xlu0 %v183, 126
    %v202 = vpop.permute.xlu0 %201
    %203 = vrot.lane.b32.xlu0 %v184, 126
    %v204 = vpop.permute.xlu0 %203
    %205 = vrot.lane.b32.xlu0 %v185, 126
    %v206 = vpop.permute.xlu0 %205
    %207 = vrot.lane.b32.xlu0 %v186, 126
    %v208 = vpop.permute.xlu0 %207
    %209 = vrot.lane.b32.xlu0 %v187, 126
    %v210 = vpop.permute.xlu0 %209
    %211 = vrot.lane.b32.xlu0 %v188, 126
    %v212 = vpop.permute.xlu0 %211
    %213 = vrot.lane.b32.xlu0 %v189, 126
    %v214 = vpop.permute.xlu0 %213
    %215 = vrot.lane.b32.xlu0 %v190, 126
    %v216 = vpop.permute.xlu0 %215
    %217 = vrot.lane.b32.xlu0 %v191, 126
    %v218 = vpop.permute.xlu0 %217
    %vm219 = vcmask 1031168
    %v220 = vsel %vm219, %v202, %v204
    %v221 = vsel %vm219, %v204, %v206
    %v222 = vsel %vm219, %v208, %v210
    %v223 = vsel %vm219, %v210, %v212
    %v224 = vsel %vm219, %v214, %v216
    %v225 = vsel %vm219, %v216, %v218
    %235 = vst [vmem:[#allocation2 + $0x90] sm:$0xff] %v220
    %236 = vst [vmem:[#allocation2 + $0x98] sm:$0xff] %v221
    %237 = vst.msk [vmem:[#allocation2 + $0xa0] sm:$0xff] %vm23, %v206
    %238 = vst [vmem:[#allocation2 + $0xa8] sm:$0xff] %v222
    %239 = vst [vmem:[#allocation2 + $0xb0] sm:$0xff] %v223
    %240 = vst.msk [vmem:[#allocation2 + $0xb8] sm:$0xff] %vm23, %v212
    %241 = vst [vmem:[#allocation2 + $0xc0] sm:$0x1] %v224
    %242 = vst [vmem:[#allocation2 + $0xc8] sm:$0x1] %v225
    %243 = vst.msk [vmem:[#allocation2 + $0xd0] sm:$0x1] %vm120, %v218
    %v244 = vld [vmem:[%s0] sm:$0xff]
    %v245 = vld [vmem:[%s0 + $0x8] sm:$0xff]
    %v246 = vld [vmem:[%s0 + $0x10] sm:$0xff]
    %v247 = vld [vmem:[%s0 + $0x18] sm:$0xff]
    %v248 = vld [vmem:[%s0 + $0x20] sm:$0xff]
    %v249 = vld [vmem:[%s0 + $0x28] sm:$0xff]
    %v250 = vld [vmem:[%s0 + $0x30] sm:$0x1]
    %v251 = vld [vmem:[%s0 + $0x38] sm:$0x1]
    %v252 = vld [vmem:[%s0 + $0x40] sm:$0x1]
    %262 = vrot.lane.b32.xlu0 %v244, 110
    %v263 = vpop.permute.xlu0 %262
    %264 = vrot.lane.b32.xlu0 %v245, 110
    %v265 = vpop.permute.xlu0 %264
    %266 = vrot.lane.b32.xlu0 %v246, 110
    %v267 = vpop.permute.xlu0 %266
    %268 = vrot.lane.b32.xlu0 %v247, 110
    %v269 = vpop.permute.xlu0 %268
    %270 = vrot.lane.b32.xlu0 %v248, 110
    %v271 = vpop.permute.xlu0 %270
    %272 = vrot.lane.b32.xlu0 %v249, 110
    %v273 = vpop.permute.xlu0 %272
    %274 = vrot.lane.b32.xlu0 %v250, 110
    %v275 = vpop.permute.xlu0 %274
    %276 = vrot.lane.b32.xlu0 %v251, 110
    %v277 = vpop.permute.xlu0 %276
    %278 = vrot.lane.b32.xlu0 %v252, 110
    %v279 = vpop.permute.xlu0 %278
    %vm280 = vcmask 900096
    %v281 = vsel %vm280, %v263, %v265
    %v282 = vsel %vm280, %v265, %v267
    %v283 = vsel %vm280, %v269, %v271
    %v284 = vsel %vm280, %v271, %v273
    %v285 = vsel %vm280, %v275, %v277
    %v286 = vsel %vm280, %v277, %v279
    %296 = vst [vmem:[#allocation2 + $0xd8] sm:$0xff] %v281
    %297 = vst [vmem:[#allocation2 + $0xe0] sm:$0xff] %v282
    %298 = vst.msk [vmem:[#allocation2 + $0xe8] sm:$0xff] %vm23, %v267
    %299 = vst [vmem:[#allocation2 + $0xf0] sm:$0xff] %v283
    %300 = vst [vmem:[#allocation2 + $0xf8] sm:$0xff] %v284
    %301 = vst.msk [vmem:[#allocation2 + $0x100] sm:$0xff] %vm23, %v273
    %302 = vst [vmem:[#allocation2 + $0x108] sm:$0x1] %v285
    %303 = vst [vmem:[#allocation2 + $0x110] sm:$0x1] %v286
    %304 = vst.msk [vmem:[#allocation2 + $0x118] sm:$0x1] %vm120, %v279
    %v305 = vld [vmem:[%s0] sm:$0xff]
    %v306 = vld [vmem:[%s0 + $0x8] sm:$0xff]
    %v307 = vld [vmem:[%s0 + $0x10] sm:$0xff]
    %v308 = vld [vmem:[%s0 + $0x18] sm:$0xff]
    %v309 = vld [vmem:[%s0 + $0x20] sm:$0xff]
    %v310 = vld [vmem:[%s0 + $0x28] sm:$0xff]
    %v311 = vld [vmem:[%s0 + $0x30] sm:$0x1]
    %v312 = vld [vmem:[%s0 + $0x38] sm:$0x1]
    %v313 = vld [vmem:[%s0 + $0x40] sm:$0x1]
    %323 = vrot.lane.b32.xlu0 %v305, 109
    %v324 = vpop.permute.xlu0 %323
    %325 = vrot.lane.b32.xlu0 %v306, 109
    %v326 = vpop.permute.xlu0 %325
    %327 = vrot.lane.b32.xlu0 %v307, 109
    %v328 = vpop.permute.xlu0 %327
    %329 = vrot.lane.b32.xlu0 %v308, 109
    %v330 = vpop.permute.xlu0 %329
    %331 = vrot.lane.b32.xlu0 %v309, 109
    %v332 = vpop.permute.xlu0 %331
    %333 = vrot.lane.b32.xlu0 %v310, 109
    %v334 = vpop.permute.xlu0 %333
    %335 = vrot.lane.b32.xlu0 %v311, 109
    %v336 = vpop.permute.xlu0 %335
    %337 = vrot.lane.b32.xlu0 %v312, 109
    %v338 = vpop.permute.xlu0 %337
    %339 = vrot.lane.b32.xlu0 %v313, 109
    %v340 = vpop.permute.xlu0 %339
    %vm341 = vcmask 891904
    %v342 = vsel %vm341, %v324, %v326
    %v343 = vsel %vm341, %v326, %v328
    %v344 = vsel %vm341, %v330, %v332
    %v345 = vsel %vm341, %v332, %v334
    %v346 = vsel %vm341, %v336, %v338
    %v347 = vsel %vm341, %v338, %v340
    %357 = vst [vmem:[#allocation2 + $0x120] sm:$0xff] %v342
    %358 = vst [vmem:[#allocation2 + $0x128] sm:$0xff] %v343
    %359 = vst.msk [vmem:[#allocation2 + $0x130] sm:$0xff] %vm23, %v328
    %360 = vst [vmem:[#allocation2 + $0x138] sm:$0xff] %v344
    %361 = vst [vmem:[#allocation2 + $0x140] sm:$0xff] %v345
    %362 = vst.msk [vmem:[#allocation2 + $0x148] sm:$0xff] %vm23, %v334
    %363 = vst [vmem:[#allocation2 + $0x150] sm:$0x1] %v346
    %364 = vst [vmem:[#allocation2 + $0x158] sm:$0x1] %v347
    %365 = vst.msk [vmem:[#allocation2 + $0x160] sm:$0x1] %vm120, %v340
    %v366 = vld [vmem:[%s0] sm:$0xff]
    %v367 = vld [vmem:[%s0 + $0x8] sm:$0xff]
    %v368 = vld [vmem:[%s0 + $0x10] sm:$0xff]
    %v369 = vld [vmem:[%s0 + $0x18] sm:$0xff]
    %v370 = vld [vmem:[%s0 + $0x20] sm:$0xff]
    %v371 = vld [vmem:[%s0 + $0x28] sm:$0xff]
    %v372 = vld [vmem:[%s0 + $0x30] sm:$0x1]
    %v373 = vld [vmem:[%s0 + $0x38] sm:$0x1]
    %v374 = vld [vmem:[%s0 + $0x40] sm:$0x1]
    %384 = vrot.lane.b32.xlu0 %v366, 108
    %v385 = vpop.permute.xlu0 %384
    %386 = vrot.lane.b32.xlu0 %v367, 108
    %v387 = vpop.permute.xlu0 %386
    %388 = vrot.lane.b32.xlu0 %v368, 108
    %v389 = vpop.permute.xlu0 %388
    %390 = vrot.lane.b32.xlu0 %v369, 108
    %v391 = vpop.permute.xlu0 %390
    %392 = vrot.lane.b32.xlu0 %v370, 108
    %v393 = vpop.permute.xlu0 %392
    %394 = vrot.lane.b32.xlu0 %v371, 108
    %v395 = vpop.permute.xlu0 %394
    %396 = vrot.lane.b32.xlu0 %v372, 108
    %v397 = vpop.permute.xlu0 %396
    %398 = vrot.lane.b32.xlu0 %v373, 108
    %v399 = vpop.permute.xlu0 %398
    %400 = vrot.lane.b32.xlu0 %v374, 108
    %v401 = vpop.permute.xlu0 %400
    %vm402 = vcmask 883712
    %v403 = vsel %vm402, %v385, %v387
    %v404 = vsel %vm402, %v387, %v389
    %v405 = vsel %vm402, %v391, %v393
    %v406 = vsel %vm402, %v393, %v395
    %v407 = vsel %vm402, %v397, %v399
    %v408 = vsel %vm402, %v399, %v401
    %418 = vst [vmem:[#allocation2 + $0x168] sm:$0xff] %v403
    %419 = vst [vmem:[#allocation2 + $0x170] sm:$0xff] %v404
    %420 = vst.msk [vmem:[#allocation2 + $0x178] sm:$0xff] %vm23, %v389
    %421 = vst [vmem:[#allocation2 + $0x180] sm:$0xff] %v405
    %422 = vst [vmem:[#allocation2 + $0x188] sm:$0xff] %v406
    %423 = vst.msk [vmem:[#allocation2 + $0x190] sm:$0xff] %vm23, %v395
    %424 = vst [vmem:[#allocation2 + $0x198] sm:$0x1] %v407
    %425 = vst [vmem:[#allocation2 + $0x1a0] sm:$0x1] %v408
    %426 = vst.msk [vmem:[#allocation2 + $0x1a8] sm:$0x1] %vm120, %v401
    %v427 = vld [vmem:[%s0] sm:$0xff]
    %v428 = vld [vmem:[%s0 + $0x8] sm:$0xff]
    %v429 = vld [vmem:[%s0 + $0x10] sm:$0xff]
    %v430 = vld [vmem:[%s0 + $0x18] sm:$0xff]
    %v431 = vld [vmem:[%s0 + $0x20] sm:$0xff]
    %v432 = vld [vmem:[%s0 + $0x28] sm:$0xff]
    %v433 = vld [vmem:[%s0 + $0x30] sm:$0x1]
    %v434 = vld [vmem:[%s0 + $0x38] sm:$0x1]
    %v435 = vld [vmem:[%s0 + $0x40] sm:$0x1]
    %445 = vrot.lane.b32.xlu0 %v427, 92
    %v446 = vpop.permute.xlu0 %445
    %447 = vrot.lane.b32.xlu0 %v428, 92
    %v448 = vpop.permute.xlu0 %447
    %449 = vrot.lane.b32.xlu0 %v429, 92
    %v450 = vpop.permute.xlu0 %449
    %451 = vrot.lane.b32.xlu0 %v430, 92
    %v452 = vpop.permute.xlu0 %451
    %453 = vrot.lane.b32.xlu0 %v431, 92
    %v454 = vpop.permute.xlu0 %453
    %455 = vrot.lane.b32.xlu0 %v432, 92
    %v456 = vpop.permute.xlu0 %455
    %457 = vrot.lane.b32.xlu0 %v433, 92
    %v458 = vpop.permute.xlu0 %457
    %459 = vrot.lane.b32.xlu0 %v434, 92
    %v460 = vpop.permute.xlu0 %459
    %461 = vrot.lane.b32.xlu0 %v435, 92
    %v462 = vpop.permute.xlu0 %461
    %vm463 = vcmask 752640
    %v464 = vsel %vm463, %v446, %v448
    %v465 = vsel %vm463, %v448, %v450
    %v466 = vsel %vm463, %v452, %v454
    %v467 = vsel %vm463, %v454, %v456
    %v468 = vsel %vm463, %v458, %v460
    %v469 = vsel %vm463, %v460, %v462
    %479 = vst [vmem:[#allocation2 + $0x1b0] sm:$0xff] %v464
    %480 = vst [vmem:[#allocation2 + $0x1b8] sm:$0xff] %v465
    %481 = vst.msk [vmem:[#allocation2 + $0x1c0] sm:$0xff] %vm23, %v450
    %482 = vst [vmem:[#allocation2 + $0x1c8] sm:$0xff] %v466
    %483 = vst [vmem:[#allocation2 + $0x1d0] sm:$0xff] %v467
    %484 = vst.msk [vmem:[#allocation2 + $0x1d8] sm:$0xff] %vm23, %v456
    %485 = vst [vmem:[#allocation2 + $0x1e0] sm:$0x1] %v468
    %486 = vst [vmem:[#allocation2 + $0x1e8] sm:$0x1] %v469
    %487 = vst.msk [vmem:[#allocation2 + $0x1f0] sm:$0x1] %vm120, %v462
    %v488 = vld [vmem:[%s0] sm:$0xff]
    %v489 = vld [vmem:[%s0 + $0x8] sm:$0xff]
    %v490 = vld [vmem:[%s0 + $0x10] sm:$0xff]
    %v491 = vld [vmem:[%s0 + $0x18] sm:$0xff]
    %v492 = vld [vmem:[%s0 + $0x20] sm:$0xff]
    %v493 = vld [vmem:[%s0 + $0x28] sm:$0xff]
    %v494 = vld [vmem:[%s0 + $0x30] sm:$0x1]
    %v495 = vld [vmem:[%s0 + $0x38] sm:$0x1]
    %v496 = vld [vmem:[%s0 + $0x40] sm:$0x1]
    %506 = vrot.lane.b32.xlu0 %v488, 91
    %v507 = vpop.permute.xlu0 %506
    %508 = vrot.lane.b32.xlu0 %v489, 91
    %v509 = vpop.permute.xlu0 %508
    %510 = vrot.lane.b32.xlu0 %v490, 91
    %v511 = vpop.permute.xlu0 %510
    %512 = vrot.lane.b32.xlu0 %v491, 91
    %v513 = vpop.permute.xlu0 %512
    %514 = vrot.lane.b32.xlu0 %v492, 91
    %v515 = vpop.permute.xlu0 %514
    %516 = vrot.lane.b32.xlu0 %v493, 91
    %v517 = vpop.permute.xlu0 %516
    %518 = vrot.lane.b32.xlu0 %v494, 91
    %v519 = vpop.permute.xlu0 %518
    %520 = vrot.lane.b32.xlu0 %v495, 91
    %v521 = vpop.permute.xlu0 %520
    %522 = vrot.lane.b32.xlu0 %v496, 91
    %v523 = vpop.permute.xlu0 %522
    %vm524 = vcmask 744448
    %v525 = vsel %vm524, %v507, %v509
    %v526 = vsel %vm524, %v509, %v511
    %v527 = vsel %vm524, %v513, %v515
    %v528 = vsel %vm524, %v515, %v517
    %v529 = vsel %vm524, %v519, %v521
    %v530 = vsel %vm524, %v521, %v523
    %540 = vst [vmem:[#allocation2 + $0x1f8] sm:$0xff] %v525
    %541 = vst [vmem:[#allocation2 + $0x200] sm:$0xff] %v526
    %542 = vst.msk [vmem:[#allocation2 + $0x208] sm:$0xff] %vm23, %v511
    %543 = vst [vmem:[#allocation2 + $0x210] sm:$0xff] %v527
    %544 = vst [vmem:[#allocation2 + $0x218] sm:$0xff] %v528
    %545 = vst.msk [vmem:[#allocation2 + $0x220] sm:$0xff] %vm23, %v517
    %546 = vst [vmem:[#allocation2 + $0x228] sm:$0x1] %v529
    %547 = vst [vmem:[#allocation2 + $0x230] sm:$0x1] %v530
    %548 = vst.msk [vmem:[#allocation2 + $0x238] sm:$0x1] %vm120, %v523
    %v549 = vld [vmem:[%s0] sm:$0xff]
    %v550 = vld [vmem:[%s0 + $0x8] sm:$0xff]
    %v551 = vld [vmem:[%s0 + $0x10] sm:$0xff]
    %v552 = vld [vmem:[%s0 + $0x18] sm:$0xff]
    %v553 = vld [vmem:[%s0 + $0x20] sm:$0xff]
    %v554 = vld [vmem:[%s0 + $0x28] sm:$0xff]
    %v555 = vld [vmem:[%s0 + $0x30] sm:$0x1]
    %v556 = vld [vmem:[%s0 + $0x38] sm:$0x1]
    %v557 = vld [vmem:[%s0 + $0x40] sm:$0x1]
    %567 = vrot.lane.b32.xlu0 %v549, 90
    %v568 = vpop.permute.xlu0 %567
    %569 = vrot.lane.b32.xlu0 %v550, 90
    %v570 = vpop.permute.xlu0 %569
    %571 = vrot.lane.b32.xlu0 %v551, 90
    %v572 = vpop.permute.xlu0 %571
    %573 = vrot.lane.b32.xlu0 %v552, 90
    %v574 = vpop.permute.xlu0 %573
    %575 = vrot.lane.b32.xlu0 %v553, 90
    %v576 = vpop.permute.xlu0 %575
    %577 = vrot.lane.b32.xlu0 %v554, 90
    %v578 = vpop.permute.xlu0 %577
    %579 = vrot.lane.b32.xlu0 %v555, 90
    %v580 = vpop.permute.xlu0 %579
    %581 = vrot.lane.b32.xlu0 %v556, 90
    %v582 = vpop.permute.xlu0 %581
    %583 = vrot.lane.b32.xlu0 %v557, 90
    %v584 = vpop.permute.xlu0 %583
    %vm585 = vcmask 736256
    %v586 = vsel %vm585, %v568, %v570
    %v587 = vsel %vm585, %v570, %v572
    %v588 = vsel %vm585, %v574, %v576
    %v589 = vsel %vm585, %v576, %v578
    %v590 = vsel %vm585, %v580, %v582
    %v591 = vsel %vm585, %v582, %v584
    %601 = vst [vmem:[#allocation2 + $0x240] sm:$0xff] %v586
    %602 = vst [vmem:[#allocation2 + $0x248] sm:$0xff] %v587
    %603 = vst.msk [vmem:[#allocation2 + $0x250] sm:$0xff] %vm23, %v572
    %604 = vst [vmem:[#allocation2 + $0x258] sm:$0xff] %v588
    %605 = vst [vmem:[#allocation2 + $0x260] sm:$0xff] %v589
    %606 = vst.msk [vmem:[#allocation2 + $0x268] sm:$0xff] %vm23, %v578
    %607 = vst [vmem:[#allocation2 + $0x270] sm:$0x1] %v590
    %608 = vst [vmem:[#allocation2 + $0x278] sm:$0x1] %v591
    %609 = vst.msk [vmem:[#allocation2 + $0x280] sm:$0x1] %vm120, %v584
    %v610 = vld [vmem:[%s1] sm:$0xff]
    %v611 = vld [vmem:[%s1 + $0x8] sm:$0xff]
    %v612 = vld [vmem:[%s1 + $0x10] sm:$0xff]
    %v613 = vld [vmem:[%s1 + $0x18] sm:$0xff]
    %v614 = vld [vmem:[%s1 + $0x20] sm:$0xff]
    %v615 = vld [vmem:[%s1 + $0x28] sm:$0xff]
    %v616 = vld [vmem:[%s1 + $0x30] sm:$0xff]
    %v617 = vld [vmem:[%s1 + $0x38] sm:$0xff]
    %v618 = vld [vmem:[#allocation2] sm:$0xff]
    %v619 = vld [vmem:[#allocation2 + $0x8] sm:$0xff]
    %v620 = vld [vmem:[#allocation2 + $0x10] sm:$0xff]
    %v621 = vld [vmem:[#allocation2 + $0x18] sm:$0xff]
    %v622 = vld [vmem:[#allocation2 + $0x20] sm:$0xff]
    %v623 = vld [vmem:[#allocation2 + $0x28] sm:$0xff]
    %v624 = vld [vmem:[#allocation2 + $0x30] sm:$0xff]
    %v625 = vld [vmem:[#allocation2 + $0x38] sm:$0xff]
    %v626 = vld [vmem:[#allocation2 + $0x40] sm:$0xff]
    %v627 = vld [vmem:[#allocation2 + $0x48] sm:$0xff]
    %v628 = vld [vmem:[#allocation2 + $0x50] sm:$0xff]
    %v629 = vld [vmem:[#allocation2 + $0x58] sm:$0xff]
    %v630 = vld [vmem:[#allocation2 + $0x60] sm:$0xff]
    %v631 = vld [vmem:[#allocation2 + $0x68] sm:$0xff]
    %v632 = vld [vmem:[#allocation2 + $0x70] sm:$0xff]
    %v633 = vld [vmem:[#allocation2 + $0x78] sm:$0xff]
    %v634 = vld [vmem:[#allocation2 + $0x80] sm:$0xff]
    %v635 = vld [vmem:[#allocation2 + $0x88] sm:$0xff]
    %v636 = vld [vmem:[#allocation2 + $0x90] sm:$0xff]
    %v637 = vld [vmem:[#allocation2 + $0x98] sm:$0xff]
    %v638 = vld [vmem:[#allocation2 + $0xa0] sm:$0xff]
    %v639 = vld [vmem:[#allocation2 + $0xa8] sm:$0xff]
    %v640 = vld [vmem:[#allocation2 + $0xb0] sm:$0xff]
    %v641 = vld [vmem:[#allocation2 + $0xb8] sm:$0xff]
    %v642 = vld [vmem:[#allocation2 + $0xc0] sm:$0xff]
    %v643 = vld [vmem:[#allocation2 + $0xc8] sm:$0xff]
    %v644 = vld [vmem:[#allocation2 + $0xd0] sm:$0xff]
    %v645 = vld [vmem:[#allocation2 + $0xd8] sm:$0xff]
    %v646 = vld [vmem:[#allocation2 + $0xe0] sm:$0xff]
    %v647 = vld [vmem:[#allocation2 + $0xe8] sm:$0xff]
    %v648 = vld [vmem:[#allocation2 + $0xf0] sm:$0xff]
    %v649 = vld [vmem:[#allocation2 + $0xf8] sm:$0xff]
    %v650 = vld [vmem:[#allocation2 + $0x100] sm:$0xff]
    %v651 = vld [vmem:[#allocation2 + $0x108] sm:$0xff]
    %v652 = vld [vmem:[#allocation2 + $0x110] sm:$0xff]
    %v653 = vld [vmem:[#allocation2 + $0x118] sm:$0xff]
    %v654 = vld [vmem:[#allocation2 + $0x120] sm:$0xff]
    %v655 = vld [vmem:[#allocation2 + $0x128] sm:$0xff]
    %v656 = vld [vmem:[#allocation2 + $0x130] sm:$0xff]
    %v657 = vld [vmem:[#allocation2 + $0x138] sm:$0xff]
    %v658 = vld [vmem:[#allocation2 + $0x140] sm:$0xff]
    %v659 = vld [vmem:[#allocation2 + $0x148] sm:$0xff]
    %v660 = vld [vmem:[#allocation2 + $0x150] sm:$0xff]
    %v661 = vld [vmem:[#allocation2 + $0x158] sm:$0xff]
    %v662 = vld [vmem:[#allocation2 + $0x160] sm:$0xff]
    %v663 = vld [vmem:[#allocation2 + $0x168] sm:$0xff]
    %v664 = vld [vmem:[#allocation2 + $0x170] sm:$0xff]
    %v665 = vld [vmem:[#allocation2 + $0x178] sm:$0xff]
    %v666 = vld [vmem:[#allocation2 + $0x180] sm:$0xff]
    %v667 = vld [vmem:[#allocation2 + $0x188] sm:$0xff]
    %v668 = vld [vmem:[#allocation2 + $0x190] sm:$0xff]
    %v669 = vld [vmem:[#allocation2 + $0x198] sm:$0xff]
    %v670 = vld [vmem:[#allocation2 + $0x1a0] sm:$0xff]
    %v671 = vld [vmem:[#allocation2 + $0x1a8] sm:$0xff]
    %v672 = vld [vmem:[#allocation2 + $0x1b0] sm:$0xff]
    %v673 = vld [vmem:[#allocation2 + $0x1b8] sm:$0xff]
    %v674 = vld [vmem:[#allocation2 + $0x1c0] sm:$0xff]
    %v675 = vld [vmem:[#allocation2 + $0x1c8] sm:$0xff]
    %v676 = vld [vmem:[#allocation2 + $0x1d0] sm:$0xff]
    %v677 = vld [vmem:[#allocation2 + $0x1d8] sm:$0xff]
    %v678 = vld [vmem:[#allocation2 + $0x1e0] sm:$0xff]
    %v679 = vld [vmem:[#allocation2 + $0x1e8] sm:$0xff]
    %v680 = vld [vmem:[#allocation2 + $0x1f0] sm:$0xff]
    %v681 = vld [vmem:[#allocation2 + $0x1f8] sm:$0xff]
    %v682 = vld [vmem:[#allocation2 + $0x200] sm:$0xff]
    %v683 = vld [vmem:[#allocation2 + $0x208] sm:$0xff]
    %v684 = vld [vmem:[#allocation2 + $0x210] sm:$0xff]
    %v685 = vld [vmem:[#allocation2 + $0x218] sm:$0xff]
    %v686 = vld [vmem:[#allocation2 + $0x220] sm:$0xff]
    %v687 = vld [vmem:[#allocation2 + $0x228] sm:$0xff]
    %v688 = vld [vmem:[#allocation2 + $0x230] sm:$0xff]
    %v689 = vld [vmem:[#allocation2 + $0x238] sm:$0xff]
    %v690 = vld [vmem:[#allocation2 + $0x240] sm:$0xff]
    %v691 = vld [vmem:[#allocation2 + $0x248] sm:$0xff]
    %v692 = vld [vmem:[#allocation2 + $0x250] sm:$0xff]
    %v693 = vld [vmem:[#allocation2 + $0x258] sm:$0xff]
    %v694 = vld [vmem:[#allocation2 + $0x260] sm:$0xff]
    %v695 = vld [vmem:[#allocation2 + $0x268] sm:$0xff]
    %v696 = vld [vmem:[#allocation2 + $0x270] sm:$0xff]
    %v697 = vld [vmem:[#allocation2 + $0x278] sm:$0xff]
    %v698 = vld [vmem:[#allocation2 + $0x280] sm:$0xff]
    %vm699 = vcmask 719872
    %v701 = vsel %vm699, %v611, 0
    %v704 = vsel %vm699, %v613, 0
    %v707 = vsel %vm699, %v615, 0
    %v710 = vsel %vm699, %v617, 0
    %712 = vmatprep.subr.mxu0 %v619
    %713 = vmatpush1.msra.mxu0 %v618
    %714 = vmatprep.subr.mxu0 %v622
    %715 = vmatpush1.msra.mxu0 %v621
    %716 = vmatprep.subr.mxu0 %v625
    %717 = vmatpush1.msra.mxu0 %v624
    %718 = vmatprep.subr.mxu0 %v628
    %719 = vmatpush1.msra.mxu0 %v627
    %720 = vmatprep.subr.mxu0 %v631
    %721 = vmatpush1.msra.mxu0 %v630
    %722 = vmatprep.subr.mxu0 %v634
    %723 = vmatpush1.msra.mxu0 %v633
    %724 = vmatprep.subr.mxu0 %v637
    %725 = vmatpush1.msra.mxu0 %v636
    %726 = vmatprep.subr.mxu0 %v640
    %727 = vmatpush1.msra.mxu0 %v639
    %728 = vmatprep.subr.mxu0 %v643
    %729 = vmatpush1.msra.mxu0 %v642
    %730 = vmatprep.subr.mxu0 %v646
    %731 = vmatpush1.msra.mxu0 %v645
    %732 = vmatprep.subr.mxu0 %v649
    %733 = vmatpush1.msra.mxu0 %v648
    %734 = vmatprep.subr.mxu0 %v652
    %735 = vmatpush1.msra.mxu0 %v651
    %736 = vmatprep.subr.mxu0 %v655
    %737 = vmatpush1.msra.mxu0 %v654
    %738 = vmatprep.subr.mxu0 %v658
    %739 = vmatpush1.msra.mxu0 %v657
    %740 = vmatprep.subr.mxu0 %v661
    %741 = vmatpush1.msra.mxu0 %v660
    %742 = vmatprep.subr.mxu0 %v664
    %743 = vmatpush1.msra.mxu0 %v663
    %744 = vmatprep.subr.mxu0 %v667
    %745 = vmatpush1.msra.mxu0 %v666
    %746 = vmatprep.subr.mxu0 %v670
    %747 = vmatpush1.msra.mxu0 %v669
    %748 = vmatprep.subr.mxu0 %v673
    %749 = vmatpush1.msra.mxu0 %v672
    %750 = vmatprep.subr.mxu0 %v676
    %751 = vmatpush1.msra.mxu0 %v675
    %752 = vmatprep.subr.mxu0 %v679
    %753 = vmatpush1.msra.mxu0 %v678
    %754 = vmatprep.subr.mxu0 %v682
    %755 = vmatpush1.msra.mxu0 %v681
    %756 = vmatprep.subr.mxu0 %v685
    %757 = vmatpush1.msra.mxu0 %v684
    %758 = vmatprep.subr.mxu0 %v688
    %759 = vmatpush1.msra.mxu0 %v687
    %760 = vmatprep.subr.mxu0 %v691
    %761 = vmatpush1.msra.mxu0 %v690
    %762 = vmatprep.subr.mxu0 %v694
    %763 = vmatpush1.msra.mxu0 %v693
    %764 = vmatprep.subr.mxu0 %v697
    %765 = vmatpush1.msra.mxu0 %v696
    %766 = vmatprep.subr.mxu0 0.0
    %767 = vmatpush1.msra.mxu0 0.0
    %768 = vmatprep.subr.mxu0 0.0
    %769 = vmatpush1.msra.mxu0 0.0
    %770 = vmatprep.subr.mxu0 0.0
    %771 = vmatpush1.msra.mxu0 0.0
    %772 = vmatprep.subr.mxu0 0.0
    %773 = vmatpush1.msra.mxu0 0.0
    %774 = vmatprep.subr.mxu0 0.0
    %775 = vmatpush1.msra.mxu0 0.0
    %776 = vmatprep.mubr.f32.mxu0 %v701
    %777 = vmatmul.mubr.f32.gmra.mrb[0].mxu0 %v610
    %v778 = vpop.f32.mrb[0].mxu0
    %v779 = vadd.f32 0.0, %v778
    %v780 = vpop.f32.mrb[0].mxu0
    %v781 = vadd.f32 0.0, %v780
    %782 = vmatprep.mubr.f32.mxu0 %v704
    %783 = vmatmul.mubr.f32.gmra.mrb[0].mxu0 %v612
    %v784 = vpop.f32.mrb[0].mxu0
    %v785 = vadd.f32 0.0, %v784
    %v786 = vpop.f32.mrb[0].mxu0
    %v787 = vadd.f32 0.0, %v786
    %788 = vmatprep.mubr.f32.mxu0 %v707
    %789 = vmatmul.mubr.f32.gmra.mrb[0].mxu0 %v614
    %v790 = vpop.f32.mrb[0].mxu0
    %v791 = vadd.f32 0.0, %v790
    %v792 = vpop.f32.mrb[0].mxu0
    %v793 = vadd.f32 0.0, %v792
    %794 = vmatprep.mubr.f32.mxu0 %v710
    %795 = vmatmul.mubr.f32.gmra.mrb[0].mxu0 %v616
    %v796 = vpop.f32.mrb[0].mxu0
    %v797 = vadd.f32 0.0, %v796
    %v798 = vpop.f32.mrb[0].mxu0
    %v799 = vadd.f32 0.0, %v798
    %800 = vdwg.mxu0
    %801 = vmatprep.subr.mxu0 0.0
    %802 = vmatpush1.msra.mxu0 %v620
    %803 = vmatprep.subr.mxu0 0.0
    %804 = vmatpush1.msra.mxu0 %v623
    %805 = vmatprep.subr.mxu0 0.0
    %806 = vmatpush1.msra.mxu0 %v626
    %807 = vmatprep.subr.mxu0 0.0
    %808 = vmatpush1.msra.mxu0 %v629
    %809 = vmatprep.subr.mxu0 0.0
    %810 = vmatpush1.msra.mxu0 %v632
    %811 = vmatprep.subr.mxu0 0.0
    %812 = vmatpush1.msra.mxu0 %v635
    %813 = vmatprep.subr.mxu0 0.0
    %814 = vmatpush1.msra.mxu0 %v638
    %815 = vmatprep.subr.mxu0 0.0
    %816 = vmatpush1.msra.mxu0 %v641
    %817 = vmatprep.subr.mxu0 0.0
    %818 = vmatpush1.msra.mxu0 %v644
    %819 = vmatprep.subr.mxu0 0.0
    %820 = vmatpush1.msra.mxu0 %v647
    %821 = vmatprep.subr.mxu0 0.0
    %822 = vmatpush1.msra.mxu0 %v650
    %823 = vmatprep.subr.mxu0 0.0
    %824 = vmatpush1.msra.mxu0 %v653
    %825 = vmatprep.subr.mxu0 0.0
    %826 = vmatpush1.msra.mxu0 %v656
    %827 = vmatprep.subr.mxu0 0.0
    %828 = vmatpush1.msra.mxu0 %v659
    %829 = vmatprep.subr.mxu0 0.0
    %830 = vmatpush1.msra.mxu0 %v662
    %831 = vmatprep.subr.mxu0 0.0
    %832 = vmatpush1.msra.mxu0 %v665
    %833 = vmatprep.subr.mxu0 0.0
    %834 = vmatpush1.msra.mxu0 %v668
    %835 = vmatprep.subr.mxu0 0.0
    %836 = vmatpush1.msra.mxu0 %v671
    %837 = vmatprep.subr.mxu0 0.0
    %838 = vmatpush1.msra.mxu0 %v674
    %839 = vmatprep.subr.mxu0 0.0
    %840 = vmatpush1.msra.mxu0 %v677
    %841 = vmatprep.subr.mxu0 0.0
    %842 = vmatpush1.msra.mxu0 %v680
    %843 = vmatprep.subr.mxu0 0.0
    %844 = vmatpush1.msra.mxu0 %v683
    %845 = vmatprep.subr.mxu0 0.0
    %846 = vmatpush1.msra.mxu0 %v686
    %847 = vmatprep.subr.mxu0 0.0
    %848 = vmatpush1.msra.mxu0 %v689
    %849 = vmatprep.subr.mxu0 0.0
    %850 = vmatpush1.msra.mxu0 %v692
    %851 = vmatprep.subr.mxu0 0.0
    %852 = vmatpush1.msra.mxu0 %v695
    %853 = vmatprep.subr.mxu0 0.0
    %854 = vmatpush1.msra.mxu0 %v698
    %855 = vmatprep.subr.mxu0 0.0
    %856 = vmatpush1.msra.mxu0 0.0
    %857 = vmatprep.subr.mxu0 0.0
    %858 = vmatpush1.msra.mxu0 0.0
    %859 = vmatprep.subr.mxu0 0.0
    %860 = vmatpush1.msra.mxu0 0.0
    %861 = vmatprep.subr.mxu0 0.0
    %862 = vmatpush1.msra.mxu0 0.0
    %863 = vmatprep.subr.mxu0 0.0
    %864 = vmatpush1.msra.mxu0 0.0
    %865 = vmatprep.mubr.f32.mxu0 %v701
    %866 = vmatmul.mubr.f32.gmra.mrb[0].mxu0 %v610
    %v867 = vpop.f32.mrb[0].mxu0
    %v868 = vadd.f32 0.0, %v867
    %v869 = vpop.f32.mrb[0].mxu0
    %870 = vmatprep.mubr.f32.mxu0 %v704
    %871 = vmatmul.mubr.f32.gmra.mrb[0].mxu0 %v612
    %v872 = vpop.f32.mrb[0].mxu0
    %v873 = vadd.f32 0.0, %v872
    %v874 = vpop.f32.mrb[0].mxu0
    %875 = vmatprep.mubr.f32.mxu0 %v707
    %876 = vmatmul.mubr.f32.gmra.mrb[0].mxu0 %v614
    %v877 = vpop.f32.mrb[0].mxu0
    %v878 = vadd.f32 0.0, %v877
    %v879 = vpop.f32.mrb[0].mxu0
    %880 = vmatprep.mubr.f32.mxu0 %v710
    %881 = vmatmul.mubr.f32.gmra.mrb[0].mxu0 %v616
    %v882 = vpop.f32.mrb[0].mxu0
    %v883 = vadd.f32 0.0, %v882
    %v884 = vpop.f32.mrb[0].mxu0
    %885 = vdwg.mxu0
    %s886 = scalar_lea.vmem %s0, 72
    %v887 = vld [vmem:[%s886] sm:$0xff]
    %v888 = vld [vmem:[%s886 + $0x8] sm:$0xff]
    %v889 = vld [vmem:[%s886 + $0x10] sm:$0xff]
    %v890 = vld [vmem:[%s886 + $0x18] sm:$0xff]
    %v891 = vld [vmem:[%s886 + $0x20] sm:$0xff]
    %v892 = vld [vmem:[%s886 + $0x28] sm:$0xff]
    %v893 = vld [vmem:[%s886 + $0x30] sm:$0x1]
    %v894 = vld [vmem:[%s886 + $0x38] sm:$0x1]
    %v895 = vld [vmem:[%s886 + $0x40] sm:$0x1]
    %896 = vst [vmem:[#allocation2] sm:$0xff] %v887
    %897 = vst [vmem:[#allocation2 + $0x8] sm:$0xff] %v888
    %898 = vst.msk [vmem:[#allocation2 + $0x10] sm:$0xff] %vm23, %v889
    %899 = vst [vmem:[#allocation2 + $0x18] sm:$0xff] %v890
    %900 = vst [vmem:[#allocation2 + $0x20] sm:$0xff] %v891
    %901 = vst.msk [vmem:[#allocation2 + $0x28] sm:$0xff] %vm23, %v892
    %902 = vst [vmem:[#allocation2 + $0x30] sm:$0x1] %v893
    %903 = vst [vmem:[#allocation2 + $0x38] sm:$0x1] %v894
    %904 = vst.msk [vmem:[#allocation2 + $0x40] sm:$0x1] %vm120, %v895
    %v905 = vld [vmem:[%s886] sm:$0xff]
    %v906 = vld [vmem:[%s886 + $0x8] sm:$0xff]
    %v907 = vld [vmem:[%s886 + $0x10] sm:$0xff]
    %v908 = vld [vmem:[%s886 + $0x18] sm:$0xff]
    %v909 = vld [vmem:[%s886 + $0x20] sm:$0xff]
    %v910 = vld [vmem:[%s886 + $0x28] sm:$0xff]
    %v911 = vld [vmem:[%s886 + $0x30] sm:$0x1]
    %v912 = vld [vmem:[%s886 + $0x38] sm:$0x1]
    %v913 = vld [vmem:[%s886 + $0x40] sm:$0x1]
    %923 = vrot.lane.b32.xlu0 %v905, 127
    %v924 = vpop.permute.xlu0 %923
    %925 = vrot.lane.b32.xlu0 %v906, 127
    %v926 = vpop.permute.xlu0 %925
    %927 = vrot.lane.b32.xlu0 %v907, 127
    %v928 = vpop.permute.xlu0 %927
    %929 = vrot.lane.b32.xlu0 %v908, 127
    %v930 = vpop.permute.xlu0 %929
    %931 = vrot.lane.b32.xlu0 %v909, 127
    %v932 = vpop.permute.xlu0 %931
    %933 = vrot.lane.b32.xlu0 %v910, 127
    %v934 = vpop.permute.xlu0 %933
    %935 = vrot.lane.b32.xlu0 %v911, 127
    %v936 = vpop.permute.xlu0 %935
    %937 = vrot.lane.b32.xlu0 %v912, 127
    %v938 = vpop.permute.xlu0 %937
    %939 = vrot.lane.b32.xlu0 %v913, 127
    %v940 = vpop.permute.xlu0 %939
    %v941 = vsel %vm158, %v924, %v926
    %v942 = vsel %vm158, %v926, %v928
    %v943 = vsel %vm158, %v930, %v932
    %v944 = vsel %vm158, %v932, %v934
    %v945 = vsel %vm158, %v936, %v938
    %v946 = vsel %vm158, %v938, %v940
    %956 = vst [vmem:[#allocation2 + $0x48] sm:$0xff] %v941
    %957 = vst [vmem:[#allocation2 + $0x50] sm:$0xff] %v942
    %958 = vst.msk [vmem:[#allocation2 + $0x58] sm:$0xff] %vm23, %v928
    %959 = vst [vmem:[#allocation2 + $0x60] sm:$0xff] %v943
    %960 = vst [vmem:[#allocation2 + $0x68] sm:$0xff] %v944
    %961 = vst.msk [vmem:[#allocation2 + $0x70] sm:$0xff] %vm23, %v934
    %962 = vst [vmem:[#allocation2 + $0x78] sm:$0x1] %v945
    %963 = vst [vmem:[#allocation2 + $0x80] sm:$0x1] %v946
    %964 = vst.msk [vmem:[#allocation2 + $0x88] sm:$0x1] %vm120, %v940
    %v965 = vld [vmem:[%s886] sm:$0xff]
    %v966 = vld [vmem:[%s886 + $0x8] sm:$0xff]
    %v967 = vld [vmem:[%s886 + $0x10] sm:$0xff]
    %v968 = vld [vmem:[%s886 + $0x18] sm:$0xff]
    %v969 = vld [vmem:[%s886 + $0x20] sm:$0xff]
    %v970 = vld [vmem:[%s886 + $0x28] sm:$0xff]
    %v971 = vld [vmem:[%s886 + $0x30] sm:$0x1]
    %v972 = vld [vmem:[%s886 + $0x38] sm:$0x1]
    %v973 = vld [vmem:[%s886 + $0x40] sm:$0x1]
    %983 = vrot.lane.b32.xlu0 %v965, 126
    %v984 = vpop.permute.xlu0 %983
    %985 = vrot.lane.b32.xlu0 %v966, 126
    %v986 = vpop.permute.xlu0 %985
    %987 = vrot.lane.b32.xlu0 %v967, 126
    %v988 = vpop.permute.xlu0 %987
    %989 = vrot.lane.b32.xlu0 %v968, 126
    %v990 = vpop.permute.xlu0 %989
    %991 = vrot.lane.b32.xlu0 %v969, 126
    %v992 = vpop.permute.xlu0 %991
    %993 = vrot.lane.b32.xlu0 %v970, 126
    %v994 = vpop.permute.xlu0 %993
    %995 = vrot.lane.b32.xlu0 %v971, 126
    %v996 = vpop.permute.xlu0 %995
    %997 = vrot.lane.b32.xlu0 %v972, 126
    %v998 = vpop.permute.xlu0 %997
    %999 = vrot.lane.b32.xlu0 %v973, 126
    %v1000 = vpop.permute.xlu0 %999
    %v1001 = vsel %vm219, %v984, %v986
    %v1002 = vsel %vm219, %v986, %v988
    %v1003 = vsel %vm219, %v990, %v992
    %v1004 = vsel %vm219, %v992, %v994
    %v1005 = vsel %vm219, %v996, %v998
    %v1006 = vsel %vm219, %v998, %v1000
    %1016 = vst [vmem:[#allocation2 + $0x90] sm:$0xff] %v1001
    %1017 = vst [vmem:[#allocation2 + $0x98] sm:$0xff] %v1002
    %1018 = vst.msk [vmem:[#allocation2 + $0xa0] sm:$0xff] %vm23, %v988
    %1019 = vst [vmem:[#allocation2 + $0xa8] sm:$0xff] %v1003
    %1020 = vst [vmem:[#allocation2 + $0xb0] sm:$0xff] %v1004
    %1021 = vst.msk [vmem:[#allocation2 + $0xb8] sm:$0xff] %vm23, %v994
    %1022 = vst [vmem:[#allocation2 + $0xc0] sm:$0x1] %v1005
    %1023 = vst [vmem:[#allocation2 + $0xc8] sm:$0x1] %v1006
    %1024 = vst.msk [vmem:[#allocation2 + $0xd0] sm:$0x1] %vm120, %v1000
    %v1025 = vld [vmem:[%s886] sm:$0xff]
    %v1026 = vld [vmem:[%s886 + $0x8] sm:$0xff]
    %v1027 = vld [vmem:[%s886 + $0x10] sm:$0xff]
    %v1028 = vld [vmem:[%s886 + $0x18] sm:$0xff]
    %v1029 = vld [vmem:[%s886 + $0x20] sm:$0xff]
    %v1030 = vld [vmem:[%s886 + $0x28] sm:$0xff]
    %v1031 = vld [vmem:[%s886 + $0x30] sm:$0x1]
    %v1032 = vld [vmem:[%s886 + $0x38] sm:$0x1]
    %v1033 = vld [vmem:[%s886 + $0x40] sm:$0x1]
    %1043 = vrot.lane.b32.xlu0 %v1025, 110
    %v1044 = vpop.permute.xlu0 %1043
    %1045 = vrot.lane.b32.xlu0 %v1026, 110
    %v1046 = vpop.permute.xlu0 %1045
    %1047 = vrot.lane.b32.xlu0 %v1027, 110
    %v1048 = vpop.permute.xlu0 %1047
    %1049 = vrot.lane.b32.xlu0 %v1028, 110
    %v1050 = vpop.permute.xlu0 %1049
    %1051 = vrot.lane.b32.xlu0 %v1029, 110
    %v1052 = vpop.permute.xlu0 %1051
    %1053 = vrot.lane.b32.xlu0 %v1030, 110
    %v1054 = vpop.permute.xlu0 %1053
    %1055 = vrot.lane.b32.xlu0 %v1031, 110
    %v1056 = vpop.permute.xlu0 %1055
    %1057 = vrot.lane.b32.xlu0 %v1032, 110
    %v1058 = vpop.permute.xlu0 %1057
    %1059 = vrot.lane.b32.xlu0 %v1033, 110
    %v1060 = vpop.permute.xlu0 %1059
    %v1061 = vsel %vm280, %v1044, %v1046
    %v1062 = vsel %vm280, %v1046, %v1048
    %v1063 = vsel %vm280, %v1050, %v1052
    %v1064 = vsel %vm280, %v1052, %v1054
    %v1065 = vsel %vm280, %v1056, %v1058
    %v1066 = vsel %vm280, %v1058, %v1060
    %1076 = vst [vmem:[#allocation2 + $0xd8] sm:$0xff] %v1061
    %1077 = vst [vmem:[#allocation2 + $0xe0] sm:$0xff] %v1062
    %1078 = vst.msk [vmem:[#allocation2 + $0xe8] sm:$0xff] %vm23, %v1048
    %1079 = vst [vmem:[#allocation2 + $0xf0] sm:$0xff] %v1063
    %1080 = vst [vmem:[#allocation2 + $0xf8] sm:$0xff] %v1064
    %1081 = vst.msk [vmem:[#allocation2 + $0x100] sm:$0xff] %vm23, %v1054
    %1082 = vst [vmem:[#allocation2 + $0x108] sm:$0x1] %v1065
    %1083 = vst [vmem:[#allocation2 + $0x110] sm:$0x1] %v1066
    %1084 = vst.msk [vmem:[#allocation2 + $0x118] sm:$0x1] %vm120, %v1060
    %v1085 = vld [vmem:[%s886] sm:$0xff]
    %v1086 = vld [vmem:[%s886 + $0x8] sm:$0xff]
    %v1087 = vld [vmem:[%s886 + $0x10] sm:$0xff]
    %v1088 = vld [vmem:[%s886 + $0x18] sm:$0xff]
    %v1089 = vld [vmem:[%s886 + $0x20] sm:$0xff]
    %v1090 = vld [vmem:[%s886 + $0x28] sm:$0xff]
    %v1091 = vld [vmem:[%s886 + $0x30] sm:$0x1]
    %v1092 = vld [vmem:[%s886 + $0x38] sm:$0x1]
    %v1093 = vld [vmem:[%s886 + $0x40] sm:$0x1]
    %1103 = vrot.lane.b32.xlu0 %v1085, 109
    %v1104 = vpop.permute.xlu0 %1103
    %1105 = vrot.lane.b32.xlu0 %v1086, 109
    %v1106 = vpop.permute.xlu0 %1105
    %1107 = vrot.lane.b32.xlu0 %v1087, 109
    %v1108 = vpop.permute.xlu0 %1107
    %1109 = vrot.lane.b32.xlu0 %v1088, 109
    %v1110 = vpop.permute.xlu0 %1109
    %1111 = vrot.lane.b32.xlu0 %v1089, 109
    %v1112 = vpop.permute.xlu0 %1111
    %1113 = vrot.lane.b32.xlu0 %v1090, 109
    %v1114 = vpop.permute.xlu0 %1113
    %1115 = vrot.lane.b32.xlu0 %v1091, 109
    %v1116 = vpop.permute.xlu0 %1115
    %1117 = vrot.lane.b32.xlu0 %v1092, 109
    %v1118 = vpop.permute.xlu0 %1117
    %1119 = vrot.lane.b32.xlu0 %v1093, 109
    %v1120 = vpop.permute.xlu0 %1119
    %v1121 = vsel %vm341, %v1104, %v1106
    %v1122 = vsel %vm341, %v1106, %v1108
    %v1123 = vsel %vm341, %v1110, %v1112
    %v1124 = vsel %vm341, %v1112, %v1114
    %v1125 = vsel %vm341, %v1116, %v1118
    %v1126 = vsel %vm341, %v1118, %v1120
    %1136 = vst [vmem:[#allocation2 + $0x120] sm:$0xff] %v1121
    %1137 = vst [vmem:[#allocation2 + $0x128] sm:$0xff] %v1122
    %1138 = vst.msk [vmem:[#allocation2 + $0x130] sm:$0xff] %vm23, %v1108
    %1139 = vst [vmem:[#allocation2 + $0x138] sm:$0xff] %v1123
    %1140 = vst [vmem:[#allocation2 + $0x140] sm:$0xff] %v1124
    %1141 = vst.msk [vmem:[#allocation2 + $0x148] sm:$0xff] %vm23, %v1114
    %1142 = vst [vmem:[#allocation2 + $0x150] sm:$0x1] %v1125
    %1143 = vst [vmem:[#allocation2 + $0x158] sm:$0x1] %v1126
    %1144 = vst.msk [vmem:[#allocation2 + $0x160] sm:$0x1] %vm120, %v1120
    %v1145 = vld [vmem:[%s886] sm:$0xff]
    %v1146 = vld [vmem:[%s886 + $0x8] sm:$0xff]
    %v1147 = vld [vmem:[%s886 + $0x10] sm:$0xff]
    %v1148 = vld [vmem:[%s886 + $0x18] sm:$0xff]
    %v1149 = vld [vmem:[%s886 + $0x20] sm:$0xff]
    %v1150 = vld [vmem:[%s886 + $0x28] sm:$0xff]
    %v1151 = vld [vmem:[%s886 + $0x30] sm:$0x1]
    %v1152 = vld [vmem:[%s886 + $0x38] sm:$0x1]
    %v1153 = vld [vmem:[%s886 + $0x40] sm:$0x1]
    %1163 = vrot.lane.b32.xlu0 %v1145, 108
    %v1164 = vpop.permute.xlu0 %1163
    %1165 = vrot.lane.b32.xlu0 %v1146, 108
    %v1166 = vpop.permute.xlu0 %1165
    %1167 = vrot.lane.b32.xlu0 %v1147, 108
    %v1168 = vpop.permute.xlu0 %1167
    %1169 = vrot.lane.b32.xlu0 %v1148, 108
    %v1170 = vpop.permute.xlu0 %1169
    %1171 = vrot.lane.b32.xlu0 %v1149, 108
    %v1172 = vpop.permute.xlu0 %1171
    %1173 = vrot.lane.b32.xlu0 %v1150, 108
    %v1174 = vpop.permute.xlu0 %1173
    %1175 = vrot.lane.b32.xlu0 %v1151, 108
    %v1176 = vpop.permute.xlu0 %1175
    %1177 = vrot.lane.b32.xlu0 %v1152, 108
    %v1178 = vpop.permute.xlu0 %1177
    %1179 = vrot.lane.b32.xlu0 %v1153, 108
    %v1180 = vpop.permute.xlu0 %1179
    %v1181 = vsel %vm402, %v1164, %v1166
    %v1182 = vsel %vm402, %v1166, %v1168
    %v1183 = vsel %vm402, %v1170, %v1172
    %v1184 = vsel %vm402, %v1172, %v1174
    %v1185 = vsel %vm402, %v1176, %v1178
    %v1186 = vsel %vm402, %v1178, %v1180
    %1196 = vst [vmem:[#allocation2 + $0x168] sm:$0xff] %v1181
    %1197 = vst [vmem:[#allocation2 + $0x170] sm:$0xff] %v1182
    %1198 = vst.msk [vmem:[#allocation2 + $0x178] sm:$0xff] %vm23, %v1168
    %1199 = vst [vmem:[#allocation2 + $0x180] sm:$0xff] %v1183
    %1200 = vst [vmem:[#allocation2 + $0x188] sm:$0xff] %v1184
    %1201 = vst.msk [vmem:[#allocation2 + $0x190] sm:$0xff] %vm23, %v1174
    %1202 = vst [vmem:[#allocation2 + $0x198] sm:$0x1] %v1185
    %1203 = vst [vmem:[#allocation2 + $0x1a0] sm:$0x1] %v1186
    %1204 = vst.msk [vmem:[#allocation2 + $0x1a8] sm:$0x1] %vm120, %v1180
    %v1205 = vld [vmem:[%s886] sm:$0xff]
    %v1206 = vld [vmem:[%s886 + $0x8] sm:$0xff]
    %v1207 = vld [vmem:[%s886 + $0x10] sm:$0xff]
    %v1208 = vld [vmem:[%s886 + $0x18] sm:$0xff]
    %v1209 = vld [vmem:[%s886 + $0x20] sm:$0xff]
    %v1210 = vld [vmem:[%s886 + $0x28] sm:$0xff]
    %v1211 = vld [vmem:[%s886 + $0x30] sm:$0x1]
    %v1212 = vld [vmem:[%s886 + $0x38] sm:$0x1]
    %v1213 = vld [vmem:[%s886 + $0x40] sm:$0x1]
    %1223 = vrot.lane.b32.xlu0 %v1205, 92
    %v1224 = vpop.permute.xlu0 %1223
    %1225 = vrot.lane.b32.xlu0 %v1206, 92
    %v1226 = vpop.permute.xlu0 %1225
    %1227 = vrot.lane.b32.xlu0 %v1207, 92
    %v1228 = vpop.permute.xlu0 %1227
    %1229 = vrot.lane.b32.xlu0 %v1208, 92
    %v1230 = vpop.permute.xlu0 %1229
    %1231 = vrot.lane.b32.xlu0 %v1209, 92
    %v1232 = vpop.permute.xlu0 %1231
    %1233 = vrot.lane.b32.xlu0 %v1210, 92
    %v1234 = vpop.permute.xlu0 %1233
    %1235 = vrot.lane.b32.xlu0 %v1211, 92
    %v1236 = vpop.permute.xlu0 %1235
    %1237 = vrot.lane.b32.xlu0 %v1212, 92
    %v1238 = vpop.permute.xlu0 %1237
    %1239 = vrot.lane.b32.xlu0 %v1213, 92
    %v1240 = vpop.permute.xlu0 %1239
    %v1241 = vsel %vm463, %v1224, %v1226
    %v1242 = vsel %vm463, %v1226, %v1228
    %v1243 = vsel %vm463, %v1230, %v1232
    %v1244 = vsel %vm463, %v1232, %v1234
    %v1245 = vsel %vm463, %v1236, %v1238
    %v1246 = vsel %vm463, %v1238, %v1240
    %1256 = vst [vmem:[#allocation2 + $0x1b0] sm:$0xff] %v1241
    %1257 = vst [vmem:[#allocation2 + $0x1b8] sm:$0xff] %v1242
    %1258 = vst.msk [vmem:[#allocation2 + $0x1c0] sm:$0xff] %vm23, %v1228
    %1259 = vst [vmem:[#allocation2 + $0x1c8] sm:$0xff] %v1243
    %1260 = vst [vmem:[#allocation2 + $0x1d0] sm:$0xff] %v1244
    %1261 = vst.msk [vmem:[#allocation2 + $0x1d8] sm:$0xff] %vm23, %v1234
    %1262 = vst [vmem:[#allocation2 + $0x1e0] sm:$0x1] %v1245
    %1263 = vst [vmem:[#allocation2 + $0x1e8] sm:$0x1] %v1246
    %1264 = vst.msk [vmem:[#allocation2 + $0x1f0] sm:$0x1] %vm120, %v1240
    %v1265 = vld [vmem:[%s886] sm:$0xff]
    %v1266 = vld [vmem:[%s886 + $0x8] sm:$0xff]
    %v1267 = vld [vmem:[%s886 + $0x10] sm:$0xff]
    %v1268 = vld [vmem:[%s886 + $0x18] sm:$0xff]
    %v1269 = vld [vmem:[%s886 + $0x20] sm:$0xff]
    %v1270 = vld [vmem:[%s886 + $0x28] sm:$0xff]
    %v1271 = vld [vmem:[%s886 + $0x30] sm:$0x1]
    %v1272 = vld [vmem:[%s886 + $0x38] sm:$0x1]
    %v1273 = vld [vmem:[%s886 + $0x40] sm:$0x1]
    %1283 = vrot.lane.b32.xlu0 %v1265, 91
    %v1284 = vpop.permute.xlu0 %1283
    %1285 = vrot.lane.b32.xlu0 %v1266, 91
    %v1286 = vpop.permute.xlu0 %1285
    %1287 = vrot.lane.b32.xlu0 %v1267, 91
    %v1288 = vpop.permute.xlu0 %1287
    %1289 = vrot.lane.b32.xlu0 %v1268, 91
    %v1290 = vpop.permute.xlu0 %1289
    %1291 = vrot.lane.b32.xlu0 %v1269, 91
    %v1292 = vpop.permute.xlu0 %1291
    %1293 = vrot.lane.b32.xlu0 %v1270, 91
    %v1294 = vpop.permute.xlu0 %1293
    %1295 = vrot.lane.b32.xlu0 %v1271, 91
    %v1296 = vpop.permute.xlu0 %1295
    %1297 = vrot.lane.b32.xlu0 %v1272, 91
    %v1298 = vpop.permute.xlu0 %1297
    %1299 = vrot.lane.b32.xlu0 %v1273, 91
    %v1300 = vpop.permute.xlu0 %1299
    %v1301 = vsel %vm524, %v1284, %v1286
    %v1302 = vsel %vm524, %v1286, %v1288
    %v1303 = vsel %vm524, %v1290, %v1292
    %v1304 = vsel %vm524, %v1292, %v1294
    %v1305 = vsel %vm524, %v1296, %v1298
    %v1306 = vsel %vm524, %v1298, %v1300
    %1316 = vst [vmem:[#allocation2 + $0x1f8] sm:$0xff] %v1301
    %1317 = vst [vmem:[#allocation2 + $0x200] sm:$0xff] %v1302
    %1318 = vst.msk [vmem:[#allocation2 + $0x208] sm:$0xff] %vm23, %v1288
    %1319 = vst [vmem:[#allocation2 + $0x210] sm:$0xff] %v1303
    %1320 = vst [vmem:[#allocation2 + $0x218] sm:$0xff] %v1304
    %1321 = vst.msk [vmem:[#allocation2 + $0x220] sm:$0xff] %vm23, %v1294
    %1322 = vst [vmem:[#allocation2 + $0x228] sm:$0x1] %v1305
    %1323 = vst [vmem:[#allocation2 + $0x230] sm:$0x1] %v1306
    %1324 = vst.msk [vmem:[#allocation2 + $0x238] sm:$0x1] %vm120, %v1300
    %v1325 = vld [vmem:[%s886] sm:$0xff]
    %v1326 = vld [vmem:[%s886 + $0x8] sm:$0xff]
    %v1327 = vld [vmem:[%s886 + $0x10] sm:$0xff]
    %v1328 = vld [vmem:[%s886 + $0x18] sm:$0xff]
    %v1329 = vld [vmem:[%s886 + $0x20] sm:$0xff]
    %v1330 = vld [vmem:[%s886 + $0x28] sm:$0xff]
    %v1331 = vld [vmem:[%s886 + $0x30] sm:$0x1]
    %v1332 = vld [vmem:[%s886 + $0x38] sm:$0x1]
    %v1333 = vld [vmem:[%s886 + $0x40] sm:$0x1]
    %1343 = vrot.lane.b32.xlu0 %v1325, 90
    %v1344 = vpop.permute.xlu0 %1343
    %1345 = vrot.lane.b32.xlu0 %v1326, 90
    %v1346 = vpop.permute.xlu0 %1345
    %1347 = vrot.lane.b32.xlu0 %v1327, 90
    %v1348 = vpop.permute.xlu0 %1347
    %1349 = vrot.lane.b32.xlu0 %v1328, 90
    %v1350 = vpop.permute.xlu0 %1349
    %1351 = vrot.lane.b32.xlu0 %v1329, 90
    %v1352 = vpop.permute.xlu0 %1351
    %1353 = vrot.lane.b32.xlu0 %v1330, 90
    %v1354 = vpop.permute.xlu0 %1353
    %1355 = vrot.lane.b32.xlu0 %v1331, 90
    %v1356 = vpop.permute.xlu0 %1355
    %1357 = vrot.lane.b32.xlu0 %v1332, 90
    %v1358 = vpop.permute.xlu0 %1357
    %1359 = vrot.lane.b32.xlu0 %v1333, 90
    %v1360 = vpop.permute.xlu0 %1359
    %v1361 = vsel %vm585, %v1344, %v1346
    %v1362 = vsel %vm585, %v1346, %v1348
    %v1363 = vsel %vm585, %v1350, %v1352
    %v1364 = vsel %vm585, %v1352, %v1354
    %v1365 = vsel %vm585, %v1356, %v1358
    %v1366 = vsel %vm585, %v1358, %v1360
    %1376 = vst [vmem:[#allocation2 + $0x240] sm:$0xff] %v1361
    %1377 = vst [vmem:[#allocation2 + $0x248] sm:$0xff] %v1362
    %1378 = vst.msk [vmem:[#allocation2 + $0x250] sm:$0xff] %vm23, %v1348
    %1379 = vst [vmem:[#allocation2 + $0x258] sm:$0xff] %v1363
    %1380 = vst [vmem:[#allocation2 + $0x260] sm:$0xff] %v1364
    %1381 = vst.msk [vmem:[#allocation2 + $0x268] sm:$0xff] %vm23, %v1354
    %1382 = vst [vmem:[#allocation2 + $0x270] sm:$0x1] %v1365
    %1383 = vst [vmem:[#allocation2 + $0x278] sm:$0x1] %v1366
    %1384 = vst.msk [vmem:[#allocation2 + $0x280] sm:$0x1] %vm120, %v1360
    %v1385 = vld [vmem:[%s1] sm:$0xff]
    %v1386 = vld [vmem:[%s1 + $0x8] sm:$0xff]
    %v1387 = vld [vmem:[%s1 + $0x10] sm:$0xff]
    %v1388 = vld [vmem:[%s1 + $0x18] sm:$0xff]
    %v1389 = vld [vmem:[%s1 + $0x20] sm:$0xff]
    %v1390 = vld [vmem:[%s1 + $0x28] sm:$0xff]
    %v1391 = vld [vmem:[%s1 + $0x30] sm:$0xff]
    %v1392 = vld [vmem:[%s1 + $0x38] sm:$0xff]
    %v1393 = vld [vmem:[#allocation2] sm:$0xff]
    %v1394 = vld [vmem:[#allocation2 + $0x8] sm:$0xff]
    %v1395 = vld [vmem:[#allocation2 + $0x10] sm:$0xff]
    %v1396 = vld [vmem:[#allocation2 + $0x18] sm:$0xff]
    %v1397 = vld [vmem:[#allocation2 + $0x20] sm:$0xff]
    %v1398 = vld [vmem:[#allocation2 + $0x28] sm:$0xff]
    %v1399 = vld [vmem:[#allocation2 + $0x30] sm:$0xff]
    %v1400 = vld [vmem:[#allocation2 + $0x38] sm:$0xff]
    %v1401 = vld [vmem:[#allocation2 + $0x40] sm:$0xff]
    %v1402 = vld [vmem:[#allocation2 + $0x48] sm:$0xff]
    %v1403 = vld [vmem:[#allocation2 + $0x50] sm:$0xff]
    %v1404 = vld [vmem:[#allocation2 + $0x58] sm:$0xff]
    %v1405 = vld [vmem:[#allocation2 + $0x60] sm:$0xff]
    %v1406 = vld [vmem:[#allocation2 + $0x68] sm:$0xff]
    %v1407 = vld [vmem:[#allocation2 + $0x70] sm:$0xff]
    %v1408 = vld [vmem:[#allocation2 + $0x78] sm:$0xff]
    %v1409 = vld [vmem:[#allocation2 + $0x80] sm:$0xff]
    %v1410 = vld [vmem:[#allocation2 + $0x88] sm:$0xff]
    %v1411 = vld [vmem:[#allocation2 + $0x90] sm:$0xff]
    %v1412 = vld [vmem:[#allocation2 + $0x98] sm:$0xff]
    %v1413 = vld [vmem:[#allocation2 + $0xa0] sm:$0xff]
    %v1414 = vld [vmem:[#allocation2 + $0xa8] sm:$0xff]
    %v1415 = vld [vmem:[#allocation2 + $0xb0] sm:$0xff]
    %v1416 = vld [vmem:[#allocation2 + $0xb8] sm:$0xff]
    %v1417 = vld [vmem:[#allocation2 + $0xc0] sm:$0xff]
    %v1418 = vld [vmem:[#allocation2 + $0xc8] sm:$0xff]
    %v1419 = vld [vmem:[#allocation2 + $0xd0] sm:$0xff]
    %v1420 = vld [vmem:[#allocation2 + $0xd8] sm:$0xff]
    %v1421 = vld [vmem:[#allocation2 + $0xe0] sm:$0xff]
    %v1422 = vld [vmem:[#allocation2 + $0xe8] sm:$0xff]
    %v1423 = vld [vmem:[#allocation2 + $0xf0] sm:$0xff]
    %v1424 = vld [vmem:[#allocation2 + $0xf8] sm:$0xff]
    %v1425 = vld [vmem:[#allocation2 + $0x100] sm:$0xff]
    %v1426 = vld [vmem:[#allocation2 + $0x108] sm:$0xff]
    %v1427 = vld [vmem:[#allocation2 + $0x110] sm:$0xff]
    %v1428 = vld [vmem:[#allocation2 + $0x118] sm:$0xff]
    %v1429 = vld [vmem:[#allocation2 + $0x120] sm:$0xff]
    %v1430 = vld [vmem:[#allocation2 + $0x128] sm:$0xff]
    %v1431 = vld [vmem:[#allocation2 + $0x130] sm:$0xff]
    %v1432 = vld [vmem:[#allocation2 + $0x138] sm:$0xff]
    %v1433 = vld [vmem:[#allocation2 + $0x140] sm:$0xff]
    %v1434 = vld [vmem:[#allocation2 + $0x148] sm:$0xff]
    %v1435 = vld [vmem:[#allocation2 + $0x150] sm:$0xff]
    %v1436 = vld [vmem:[#allocation2 + $0x158] sm:$0xff]
    %v1437 = vld [vmem:[#allocation2 + $0x160] sm:$0xff]
    %v1438 = vld [vmem:[#allocation2 + $0x168] sm:$0xff]
    %v1439 = vld [vmem:[#allocation2 + $0x170] sm:$0xff]
    %v1440 = vld [vmem:[#allocation2 + $0x178] sm:$0xff]
    %v1441 = vld [vmem:[#allocation2 + $0x180] sm:$0xff]
    %v1442 = vld [vmem:[#allocation2 + $0x188] sm:$0xff]
    %v1443 = vld [vmem:[#allocation2 + $0x190] sm:$0xff]
    %v1444 = vld [vmem:[#allocation2 + $0x198] sm:$0xff]
    %v1445 = vld [vmem:[#allocation2 + $0x1a0] sm:$0xff]
    %v1446 = vld [vmem:[#allocation2 + $0x1a8] sm:$0xff]
    %v1447 = vld [vmem:[#allocation2 + $0x1b0] sm:$0xff]
    %v1448 = vld [vmem:[#allocation2 + $0x1b8] sm:$0xff]
    %v1449 = vld [vmem:[#allocation2 + $0x1c0] sm:$0xff]
    %v1450 = vld [vmem:[#allocation2 + $0x1c8] sm:$0xff]
    %v1451 = vld [vmem:[#allocation2 + $0x1d0] sm:$0xff]
    %v1452 = vld [vmem:[#allocation2 + $0x1d8] sm:$0xff]
    %v1453 = vld [vmem:[#allocation2 + $0x1e0] sm:$0xff]
    %v1454 = vld [vmem:[#allocation2 + $0x1e8] sm:$0xff]
    %v1455 = vld [vmem:[#allocation2 + $0x1f0] sm:$0xff]
    %v1456 = vld [vmem:[#allocation2 + $0x1f8] sm:$0xff]
    %v1457 = vld [vmem:[#allocation2 + $0x200] sm:$0xff]
    %v1458 = vld [vmem:[#allocation2 + $0x208] sm:$0xff]
    %v1459 = vld [vmem:[#allocation2 + $0x210] sm:$0xff]
    %v1460 = vld [vmem:[#allocation2 + $0x218] sm:$0xff]
    %v1461 = vld [vmem:[#allocation2 + $0x220] sm:$0xff]
    %v1462 = vld [vmem:[#allocation2 + $0x228] sm:$0xff]
    %v1463 = vld [vmem:[#allocation2 + $0x230] sm:$0xff]
    %v1464 = vld [vmem:[#allocation2 + $0x238] sm:$0xff]
    %v1465 = vld [vmem:[#allocation2 + $0x240] sm:$0xff]
    %v1466 = vld [vmem:[#allocation2 + $0x248] sm:$0xff]
    %v1467 = vld [vmem:[#allocation2 + $0x250] sm:$0xff]
    %v1468 = vld [vmem:[#allocation2 + $0x258] sm:$0xff]
    %v1469 = vld [vmem:[#allocation2 + $0x260] sm:$0xff]
    %v1470 = vld [vmem:[#allocation2 + $0x268] sm:$0xff]
    %v1471 = vld [vmem:[#allocation2 + $0x270] sm:$0xff]
    %v1472 = vld [vmem:[#allocation2 + $0x278] sm:$0xff]
    %v1473 = vld [vmem:[#allocation2 + $0x280] sm:$0xff]
    %v1475 = vsel %vm699, %v1386, 0
    %v1478 = vsel %vm699, %v1388, 0
    %v1481 = vsel %vm699, %v1390, 0
    %v1484 = vsel %vm699, %v1392, 0
    %1486 = vmatprep.subr.mxu0 %v1394
    %1487 = vmatpush1.msra.mxu0 %v1393
    %1488 = vmatprep.subr.mxu0 %v1397
    %1489 = vmatpush1.msra.mxu0 %v1396
    %1490 = vmatprep.subr.mxu0 %v1400
    %1491 = vmatpush1.msra.mxu0 %v1399
    %1492 = vmatprep.subr.mxu0 %v1403
    %1493 = vmatpush1.msra.mxu0 %v1402
    %1494 = vmatprep.subr.mxu0 %v1406
    %1495 = vmatpush1.msra.mxu0 %v1405
    %1496 = vmatprep.subr.mxu0 %v1409
    %1497 = vmatpush1.msra.mxu0 %v1408
    %1498 = vmatprep.subr.mxu0 %v1412
    %1499 = vmatpush1.msra.mxu0 %v1411
    %1500 = vmatprep.subr.mxu0 %v1415
    %1501 = vmatpush1.msra.mxu0 %v1414
    %1502 = vmatprep.subr.mxu0 %v1418
    %1503 = vmatpush1.msra.mxu0 %v1417
    %1504 = vmatprep.subr.mxu0 %v1421
    %1505 = vmatpush1.msra.mxu0 %v1420
    %1506 = vmatprep.subr.mxu0 %v1424
    %1507 = vmatpush1.msra.mxu0 %v1423
    %1508 = vmatprep.subr.mxu0 %v1427
    %1509 = vmatpush1.msra.mxu0 %v1426
    %1510 = vmatprep.subr.mxu0 %v1430
    %1511 = vmatpush1.msra.mxu0 %v1429
    %1512 = vmatprep.subr.mxu0 %v1433
    %1513 = vmatpush1.msra.mxu0 %v1432
    %1514 = vmatprep.subr.mxu0 %v1436
    %1515 = vmatpush1.msra.mxu0 %v1435
    %1516 = vmatprep.subr.mxu0 %v1439
    %1517 = vmatpush1.msra.mxu0 %v1438
    %1518 = vmatprep.subr.mxu0 %v1442
    %1519 = vmatpush1.msra.mxu0 %v1441
    %1520 = vmatprep.subr.mxu0 %v1445
    %1521 = vmatpush1.msra.mxu0 %v1444
    %1522 = vmatprep.subr.mxu0 %v1448
    %1523 = vmatpush1.msra.mxu0 %v1447
    %1524 = vmatprep.subr.mxu0 %v1451
    %1525 = vmatpush1.msra.mxu0 %v1450
    %1526 = vmatprep.subr.mxu0 %v1454
    %1527 = vmatpush1.msra.mxu0 %v1453
    %1528 = vmatprep.subr.mxu0 %v1457
    %1529 = vmatpush1.msra.mxu0 %v1456
    %1530 = vmatprep.subr.mxu0 %v1460
    %1531 = vmatpush1.msra.mxu0 %v1459
    %1532 = vmatprep.subr.mxu0 %v1463
    %1533 = vmatpush1.msra.mxu0 %v1462
    %1534 = vmatprep.subr.mxu0 %v1466
    %1535 = vmatpush1.msra.mxu0 %v1465
    %1536 = vmatprep.subr.mxu0 %v1469
    %1537 = vmatpush1.msra.mxu0 %v1468
    %1538 = vmatprep.subr.mxu0 %v1472
    %1539 = vmatpush1.msra.mxu0 %v1471
    %1540 = vmatprep.subr.mxu0 0.0
    %1541 = vmatpush1.msra.mxu0 0.0
    %1542 = vmatprep.subr.mxu0 0.0
    %1543 = vmatpush1.msra.mxu0 0.0
    %1544 = vmatprep.subr.mxu0 0.0
    %1545 = vmatpush1.msra.mxu0 0.0
    %1546 = vmatprep.subr.mxu0 0.0
    %1547 = vmatpush1.msra.mxu0 0.0
    %1548 = vmatprep.subr.mxu0 0.0
    %1549 = vmatpush1.msra.mxu0 0.0
    %1550 = vmatprep.mubr.f32.mxu0 %v1475
    %1551 = vmatmul.mubr.f32.gmra.mrb[0].mxu0 %v1385
    %v1552 = vpop.f32.mrb[0].mxu0
    %v1553 = vadd.f32 0.0, %v1552
    %v1554 = vpop.f32.mrb[0].mxu0
    %v1555 = vadd.f32 0.0, %v1554
    %1556 = vmatprep.mubr.f32.mxu0 %v1478
    %1557 = vmatmul.mubr.f32.gmra.mrb[0].mxu0 %v1387
    %v1558 = vpop.f32.mrb[0].mxu0
    %v1559 = vadd.f32 0.0, %v1558
    %v1560 = vpop.f32.mrb[0].mxu0
    %v1561 = vadd.f32 0.0, %v1560
    %1562 = vmatprep.mubr.f32.mxu0 %v1481
    %1563 = vmatmul.mubr.f32.gmra.mrb[0].mxu0 %v1389
    %v1564 = vpop.f32.mrb[0].mxu0
    %v1565 = vadd.f32 0.0, %v1564
    %v1566 = vpop.f32.mrb[0].mxu0
    %v1567 = vadd.f32 0.0, %v1566
    %1568 = vmatprep.mubr.f32.mxu0 %v1484
    %1569 = vmatmul.mubr.f32.gmra.mrb[0].mxu0 %v1391
    %v1570 = vpop.f32.mrb[0].mxu0
    %v1571 = vadd.f32 0.0, %v1570
    %v1572 = vpop.f32.mrb[0].mxu0
    %v1573 = vadd.f32 0.0, %v1572
    %1574 = vdwg.mxu0
    %1575 = vmatprep.subr.mxu0 0.0
    %1576 = vmatpush1.msra.mxu0 %v1395
    %1577 = vmatprep.subr.mxu0 0.0
    %1578 = vmatpush1.msra.mxu0 %v1398
    %1579 = vmatprep.subr.mxu0 0.0
    %1580 = vmatpush1.msra.mxu0 %v1401
    %1581 = vmatprep.subr.mxu0 0.0
    %1582 = vmatpush1.msra.mxu0 %v1404
    %1583 = vmatprep.subr.mxu0 0.0
    %1584 = vmatpush1.msra.mxu0 %v1407
    %1585 = vmatprep.subr.mxu0 0.0
    %1586 = vmatpush1.msra.mxu0 %v1410
    %1587 = vmatprep.subr.mxu0 0.0
    %1588 = vmatpush1.msra.mxu0 %v1413
    %1589 = vmatprep.subr.mxu0 0.0
    %1590 = vmatpush1.msra.mxu0 %v1416
    %1591 = vmatprep.subr.mxu0 0.0
    %1592 = vmatpush1.msra.mxu0 %v1419
    %1593 = vmatprep.subr.mxu0 0.0
    %1594 = vmatpush1.msra.mxu0 %v1422
    %1595 = vmatprep.subr.mxu0 0.0
    %1596 = vmatpush1.msra.mxu0 %v1425
    %1597 = vmatprep.subr.mxu0 0.0
    %1598 = vmatpush1.msra.mxu0 %v1428
    %1599 = vmatprep.subr.mxu0 0.0
    %1600 = vmatpush1.msra.mxu0 %v1431
    %1601 = vmatprep.subr.mxu0 0.0
    %1602 = vmatpush1.msra.mxu0 %v1434
    %1603 = vmatprep.subr.mxu0 0.0
    %1604 = vmatpush1.msra.mxu0 %v1437
    %1605 = vmatprep.subr.mxu0 0.0
    %1606 = vmatpush1.msra.mxu0 %v1440
    %1607 = vmatprep.subr.mxu0 0.0
    %1608 = vmatpush1.msra.mxu0 %v1443
    %1609 = vmatprep.subr.mxu0 0.0
    %1610 = vmatpush1.msra.mxu0 %v1446
    %1611 = vmatprep.subr.mxu0 0.0
    %1612 = vmatpush1.msra.mxu0 %v1449
    %1613 = vmatprep.subr.mxu0 0.0
    %1614 = vmatpush1.msra.mxu0 %v1452
    %1615 = vmatprep.subr.mxu0 0.0
    %1616 = vmatpush1.msra.mxu0 %v1455
    %1617 = vmatprep.subr.mxu0 0.0
    %1618 = vmatpush1.msra.mxu0 %v1458
    %1619 = vmatprep.subr.mxu0 0.0
    %1620 = vmatpush1.msra.mxu0 %v1461
    %1621 = vmatprep.subr.mxu0 0.0
    %1622 = vmatpush1.msra.mxu0 %v1464
    %1623 = vmatprep.subr.mxu0 0.0
    %1624 = vmatpush1.msra.mxu0 %v1467
    %1625 = vmatprep.subr.mxu0 0.0
    %1626 = vmatpush1.msra.mxu0 %v1470
    %1627 = vmatprep.subr.mxu0 0.0
    %1628 = vmatpush1.msra.mxu0 %v1473
    %1629 = vmatprep.subr.mxu0 0.0
    %1630 = vmatpush1.msra.mxu0 0.0
    %1631 = vmatprep.subr.mxu0 0.0
    %1632 = vmatpush1.msra.mxu0 0.0
    %1633 = vmatprep.subr.mxu0 0.0
    %1634 = vmatpush1.msra.mxu0 0.0
    %1635 = vmatprep.subr.mxu0 0.0
    %1636 = vmatpush1.msra.mxu0 0.0
    %1637 = vmatprep.subr.mxu0 0.0
    %1638 = vmatpush1.msra.mxu0 0.0
    %1639 = vmatprep.mubr.f32.mxu0 %v1475
    %1640 = vmatmul.mubr.f32.gmra.mrb[0].mxu0 %v1385
    %v1641 = vpop.f32.mrb[0].mxu0
    %v1642 = vadd.f32 0.0, %v1641
    %v1643 = vpop.f32.mrb[0].mxu0
    %1644 = vmatprep.mubr.f32.mxu0 %v1478
    %1645 = vmatmul.mubr.f32.gmra.mrb[0].mxu0 %v1387
    %v1646 = vpop.f32.mrb[0].mxu0
    %v1647 = vadd.f32 0.0, %v1646
    %v1648 = vpop.f32.mrb[0].mxu0
    %1649 = vmatprep.mubr.f32.mxu0 %v1481
    %1650 = vmatmul.mubr.f32.gmra.mrb[0].mxu0 %v1389
    %v1651 = vpop.f32.mrb[0].mxu0
    %v1652 = vadd.f32 0.0, %v1651
    %v1653 = vpop.f32.mrb[0].mxu0
    %1654 = vmatprep.mubr.f32.mxu0 %v1484
    %1655 = vmatmul.mubr.f32.gmra.mrb[0].mxu0 %v1391
    %v1656 = vpop.f32.mrb[0].mxu0
    %v1657 = vadd.f32 0.0, %v1656
    %v1658 = vpop.f32.mrb[0].mxu0
    %1659 = vdwg.mxu0
    %v1660 = vld [vmem:[%s2] sm:$0x7]
    %v1662 = vlaneseq
    %v1663 = vshrl.u32 %v1662, 7
    %v1664 = vsub.s32 0, %v1663
    %v1665 = vrot.slane %v1660, %v1664
    %v1666 = vlaneseq
    %v1667 = vshrl.u32 %v1666, 7
    %v1668 = vsub.s32 1, %v1667
    %v1669 = vrot.slane %v1660, %v1668
    %v1670 = vlaneseq
    %v1671 = vshrl.u32 %v1670, 7
    %v1672 = vsub.s32 2, %v1671
    %v1673 = vrot.slane %v1660, %v1672
    %v1677 = vmul.f32 %v779, %v1665
    %v1678 = vmul.f32 %v781, %v1669
    %v1679 = vmul.f32 %v868, %v1673
    %v1680 = vmul.f32 %v785, %v1665
    %v1681 = vmul.f32 %v787, %v1669
    %v1682 = vmul.f32 %v873, %v1673
    %v1683 = vmul.f32 %v791, %v1665
    %v1684 = vmul.f32 %v793, %v1669
    %v1685 = vmul.f32 %v878, %v1673
    %v1686 = vmul.f32 %v797, %v1665
    %v1687 = vmul.f32 %v799, %v1669
    %v1688 = vmul.f32 %v883, %v1673
    %v1689 = vadd.f32 %v1677, %v1678
    %v1690 = vsel %vm23, %v1679, 0.0
    %v1691 = vadd.f32 %v1689, %v1690
    %1692 = vadd.xlane.f32.xlu0 %v1691
    %v1693 = vpop.xlane.xlu0 %1692
    %v1694 = vadd.f32 %v1680, %v1681
    %v1695 = vsel %vm23, %v1682, 0.0
    %v1696 = vadd.f32 %v1694, %v1695
    %1697 = vadd.xlane.f32.xlu0 %v1696
    %v1698 = vpop.xlane.xlu0 %1697
    %v1699 = vadd.f32 %v1683, %v1684
    %v1700 = vsel %vm23, %v1685, 0.0
    %v1701 = vadd.f32 %v1699, %v1700
    %1702 = vadd.xlane.f32.xlu0 %v1701
    %v1703 = vpop.xlane.xlu0 %1702
    %v1704 = vadd.f32 %v1686, %v1687
    %v1705 = vsel %vm23, %v1688, 0.0
    %v1706 = vadd.f32 %v1704, %v1705
    %1707 = vadd.xlane.f32.xlu0 %v1706
    %v1708 = vpop.xlane.xlu0 %1707
    %v1709 = vadd.f32 %v1693, 0.0
    %v1710 = vadd.f32 %v1698, 0.0
    %v1711 = vadd.f32 %v1703, 0.0
    %v1712 = vadd.f32 %v1708, 0.0
    %v1713 = vmul.f32 %v1553, %v1665
    %v1714 = vmul.f32 %v1555, %v1669
    %v1715 = vmul.f32 %v1642, %v1673
    %v1716 = vmul.f32 %v1559, %v1665
    %v1717 = vmul.f32 %v1561, %v1669
    %v1718 = vmul.f32 %v1647, %v1673
    %v1719 = vmul.f32 %v1565, %v1665
    %v1720 = vmul.f32 %v1567, %v1669
    %v1721 = vmul.f32 %v1652, %v1673
    %v1722 = vmul.f32 %v1571, %v1665
    %v1723 = vmul.f32 %v1573, %v1669
    %v1724 = vmul.f32 %v1657, %v1673
    %v1725 = vadd.f32 %v1713, %v1714
    %v1726 = vsel %vm23, %v1715, 0.0
    %v1727 = vadd.f32 %v1725, %v1726
    %1728 = vadd.xlane.f32.xlu0 %v1727
    %v1729 = vpop.xlane.xlu0 %1728
    %v1730 = vadd.f32 %v1716, %v1717
    %v1731 = vsel %vm23, %v1718, 0.0
    %v1732 = vadd.f32 %v1730, %v1731
    %1733 = vadd.xlane.f32.xlu0 %v1732
    %v1734 = vpop.xlane.xlu0 %1733
    %v1735 = vadd.f32 %v1719, %v1720
    %v1736 = vsel %vm23, %v1721, 0.0
    %v1737 = vadd.f32 %v1735, %v1736
    %1738 = vadd.xlane.f32.xlu0 %v1737
    %v1739 = vpop.xlane.xlu0 %1738
    %v1740 = vadd.f32 %v1722, %v1723
    %v1741 = vsel %vm23, %v1724, 0.0
    %v1742 = vadd.f32 %v1740, %v1741
    %1743 = vadd.xlane.f32.xlu0 %v1742
    %v1744 = vpop.xlane.xlu0 %1743
    %v1745 = vadd.f32 %v1709, %v1729
    %v1746 = vadd.f32 %v1710, %v1734
    %v1747 = vadd.f32 %v1711, %v1739
    %v1748 = vadd.f32 %v1712, %v1744
    %v1749 = vmul.f32 %v1745, 0.001953125
    %v1750 = vmul.f32 %v1746, 0.001953125
    %v1751 = vmul.f32 %v1747, 0.001953125
    %v1752 = vmul.f32 %v1748, 0.001953125
    %v1753 = vsub.f32 %v779, %v1749
    %v1754 = vsub.f32 %v781, %v1749
    %v1755 = vsub.f32 %v868, %v1749
    %v1756 = vsub.f32 %v785, %v1750
    %v1757 = vsub.f32 %v787, %v1750
    %v1758 = vsub.f32 %v873, %v1750
    %v1759 = vsub.f32 %v791, %v1751
    %v1760 = vsub.f32 %v793, %v1751
    %v1761 = vsub.f32 %v878, %v1751
    %v1762 = vsub.f32 %v797, %v1752
    %v1763 = vsub.f32 %v799, %v1752
    %v1764 = vsub.f32 %v883, %v1752
    %v1765 = vmul.f32 %v1753, %v1665
    %v1766 = vmul.f32 %v1754, %v1669
    %v1767 = vmul.f32 %v1755, %v1673
    %v1768 = vmul.f32 %v1756, %v1665
    %v1769 = vmul.f32 %v1757, %v1669
    %v1770 = vmul.f32 %v1758, %v1673
    %v1771 = vmul.f32 %v1759, %v1665
    %v1772 = vmul.f32 %v1760, %v1669
    %v1773 = vmul.f32 %v1761, %v1673
    %v1774 = vmul.f32 %v1762, %v1665
    %v1775 = vmul.f32 %v1763, %v1669
    %v1776 = vmul.f32 %v1764, %v1673
    %v1777 = vmul.f32 %v1765, %v1765
    %v1778 = vmul.f32 %v1766, %v1766
    %v1779 = vmul.f32 %v1767, %v1767
    %v1780 = vmul.f32 %v1768, %v1768
    %v1781 = vmul.f32 %v1769, %v1769
    %v1782 = vmul.f32 %v1770, %v1770
    %v1783 = vmul.f32 %v1771, %v1771
    %v1784 = vmul.f32 %v1772, %v1772
    %v1785 = vmul.f32 %v1773, %v1773
    %v1786 = vmul.f32 %v1774, %v1774
    %v1787 = vmul.f32 %v1775, %v1775
    %v1788 = vmul.f32 %v1776, %v1776
    %v1789 = vadd.f32 %v1777, %v1778
    %v1790 = vsel %vm23, %v1779, 0.0
    %v1791 = vadd.f32 %v1789, %v1790
    %1792 = vadd.xlane.f32.xlu0 %v1791
    %v1793 = vpop.xlane.xlu0 %1792
    %v1794 = vadd.f32 %v1780, %v1781
    %v1795 = vsel %vm23, %v1782, 0.0
    %v1796 = vadd.f32 %v1794, %v1795
    %1797 = vadd.xlane.f32.xlu0 %v1796
    %v1798 = vpop.xlane.xlu0 %1797
    %v1799 = vadd.f32 %v1783, %v1784
    %v1800 = vsel %vm23, %v1785, 0.0
    %v1801 = vadd.f32 %v1799, %v1800
    %1802 = vadd.xlane.f32.xlu0 %v1801
    %v1803 = vpop.xlane.xlu0 %1802
    %v1804 = vadd.f32 %v1786, %v1787
    %v1805 = vsel %vm23, %v1788, 0.0
    %v1806 = vadd.f32 %v1804, %v1805
    %1807 = vadd.xlane.f32.xlu0 %v1806
    %v1808 = vpop.xlane.xlu0 %1807
    %v1809 = vadd.f32 %v1793, 0.0
    %v1810 = vadd.f32 %v1798, 0.0
    %v1811 = vadd.f32 %v1803, 0.0
    %v1812 = vadd.f32 %v1808, 0.0
    %v1813 = vsub.f32 %v1553, %v1749
    %v1814 = vsub.f32 %v1555, %v1749
    %v1815 = vsub.f32 %v1642, %v1749
    %v1816 = vsub.f32 %v1559, %v1750
    %v1817 = vsub.f32 %v1561, %v1750
    %v1818 = vsub.f32 %v1647, %v1750
    %v1819 = vsub.f32 %v1565, %v1751
    %v1820 = vsub.f32 %v1567, %v1751
    %v1821 = vsub.f32 %v1652, %v1751
    %v1822 = vsub.f32 %v1571, %v1752
    %v1823 = vsub.f32 %v1573, %v1752
    %v1824 = vsub.f32 %v1657, %v1752
    %v1825 = vmul.f32 %v1813, %v1665
    %v1826 = vmul.f32 %v1814, %v1669
    %v1827 = vmul.f32 %v1815, %v1673
    %v1828 = vmul.f32 %v1816, %v1665
    %v1829 = vmul.f32 %v1817, %v1669
    %v1830 = vmul.f32 %v1818, %v1673
    %v1831 = vmul.f32 %v1819, %v1665
    %v1832 = vmul.f32 %v1820, %v1669
    %v1833 = vmul.f32 %v1821, %v1673
    %v1834 = vmul.f32 %v1822, %v1665
    %v1835 = vmul.f32 %v1823, %v1669
    %v1836 = vmul.f32 %v1824, %v1673
    %v1837 = vmul.f32 %v1825, %v1825
    %v1838 = vmul.f32 %v1826, %v1826
    %v1839 = vmul.f32 %v1827, %v1827
    %v1840 = vmul.f32 %v1828, %v1828
    %v1841 = vmul.f32 %v1829, %v1829
    %v1842 = vmul.f32 %v1830, %v1830
    %v1843 = vmul.f32 %v1831, %v1831
    %v1844 = vmul.f32 %v1832, %v1832
    %v1845 = vmul.f32 %v1833, %v1833
    %v1846 = vmul.f32 %v1834, %v1834
    %v1847 = vmul.f32 %v1835, %v1835
    %v1848 = vmul.f32 %v1836, %v1836
    %v1849 = vadd.f32 %v1837, %v1838
    %v1850 = vsel %vm23, %v1839, 0.0
    %v1851 = vadd.f32 %v1849, %v1850
    %1852 = vadd.xlane.f32.xlu0 %v1851
    %v1853 = vpop.xlane.xlu0 %1852
    %v1854 = vadd.f32 %v1840, %v1841
    %v1855 = vsel %vm23, %v1842, 0.0
    %v1856 = vadd.f32 %v1854, %v1855
    %1857 = vadd.xlane.f32.xlu0 %v1856
    %v1858 = vpop.xlane.xlu0 %1857
    %v1859 = vadd.f32 %v1843, %v1844
    %v1860 = vsel %vm23, %v1845, 0.0
    %v1861 = vadd.f32 %v1859, %v1860
    %1862 = vadd.xlane.f32.xlu0 %v1861
    %v1863 = vpop.xlane.xlu0 %1862
    %v1864 = vadd.f32 %v1846, %v1847
    %v1865 = vsel %vm23, %v1848, 0.0
    %v1866 = vadd.f32 %v1864, %v1865
    %1867 = vadd.xlane.f32.xlu0 %v1866
    %v1868 = vpop.xlane.xlu0 %1867
    %v1869 = vadd.f32 %v1809, %v1853
    %v1870 = vadd.f32 %v1810, %v1858
    %v1871 = vadd.f32 %v1811, %v1863
    %v1872 = vadd.f32 %v1812, %v1868
    %v1873 = vmul.f32 %v1869, 0.001953125
    %v1874 = vmul.f32 %v1870, 0.001953125
    %v1875 = vmul.f32 %v1871, 0.001953125
    %v1876 = vmul.f32 %v1872, 0.001953125
    %v1877 = vld [vmem:[%s3] sm:$0xff]
    %v1878 = vld [vmem:[%s3 + $0x8] sm:$0xff]
    %v1879 = vld [vmem:[%s3 + $0x10] sm:$0xff]
    %v1880 = vld [vmem:[%s3 + $0x18] sm:$0xff]
    %v1881 = vadd.f32 %v1873, 1e-05
    %v1882 = vadd.f32 %v1874, 1e-05
    %v1883 = vadd.f32 %v1875, 1e-05
    %v1884 = vadd.f32 %v1876, 1e-05
    %v1885 = vrsqrt.pop %v1881
    %v1886 = vrsqrt.pop %v1882
    %v1887 = vrsqrt.pop %v1883
    %v1888 = vrsqrt.pop %v1884
    %v1889 = vmul.f32 %v1877, %v1885
    %v1890 = vmul.f32 %v1878, %v1886
    %v1891 = vmul.f32 %v1879, %v1887
    %v1892 = vmul.f32 %v1880, %v1888
    %v1893 = vld [vmem:[%s4] sm:$0xff]
    %v1894 = vld [vmem:[%s4 + $0x8] sm:$0xff]
    %v1895 = vld [vmem:[%s4 + $0x10] sm:$0xff]
    %v1896 = vld [vmem:[%s4 + $0x18] sm:$0xff]
    %v1897 = vmul.f32 %v1749, %v1889
    %v1898 = vmul.f32 %v1750, %v1890
    %v1899 = vmul.f32 %v1751, %v1891
    %v1900 = vmul.f32 %v1752, %v1892
    %v1901 = vsub.f32 %v1893, %v1897
    %v1902 = vsub.f32 %v1894, %v1898
    %v1903 = vsub.f32 %v1895, %v1899
    %v1904 = vsub.f32 %v1896, %v1900
    %1906 = vset.pattern.permute.xlu0 0
    %1907 = vperm.xlu0 %1906, %v1889
    %v1908 = vpop.permute.xlu0 %1907
    %1911 = vset.pattern.permute.xlu0 0
    %1912 = vperm.xlu0 %1911, %v1890
    %v1913 = vpop.permute.xlu0 %1912
    %1916 = vset.pattern.permute.xlu0 0
    %1917 = vperm.xlu0 %1916, %v1891
    %v1918 = vpop.permute.xlu0 %1917
    %1921 = vset.pattern.permute.xlu0 0
    %1922 = vperm.xlu0 %1921, %v1892
    %v1923 = vpop.permute.xlu0 %1922
    %v1925 = vmul.f32 %v779, %v1908
    %v1926 = vmul.f32 %v781, %v1908
    %v1927 = vmul.f32 %v868, %v1908
    %v1928 = vmul.f32 %v785, %v1913
    %v1929 = vmul.f32 %v787, %v1913
    %v1930 = vmul.f32 %v873, %v1913
    %v1931 = vmul.f32 %v791, %v1918
    %v1932 = vmul.f32 %v793, %v1918
    %v1933 = vmul.f32 %v878, %v1918
    %v1934 = vmul.f32 %v797, %v1923
    %v1935 = vmul.f32 %v799, %v1923
    %v1936 = vmul.f32 %v883, %v1923
    %1938 = vset.pattern.permute.xlu0 0
    %1939 = vperm.xlu0 %1938, %v1901
    %v1940 = vpop.permute.xlu0 %1939
    %1943 = vset.pattern.permute.xlu0 0
    %1944 = vperm.xlu0 %1943, %v1902
    %v1945 = vpop.permute.xlu0 %1944
    %1948 = vset.pattern.permute.xlu0 0
    %1949 = vperm.xlu0 %1948, %v1903
    %v1950 = vpop.permute.xlu0 %1949
    %1953 = vset.pattern.permute.xlu0 0
    %1954 = vperm.xlu0 %1953, %v1904
    %v1955 = vpop.permute.xlu0 %1954
    %v1957 = vadd.f32 %v1925, %v1940
    %v1958 = vadd.f32 %v1926, %v1940
    %v1959 = vadd.f32 %v1927, %v1940
    %v1960 = vadd.f32 %v1928, %v1945
    %v1961 = vadd.f32 %v1929, %v1945
    %v1962 = vadd.f32 %v1930, %v1945
    %v1963 = vadd.f32 %v1931, %v1950
    %v1964 = vadd.f32 %v1932, %v1950
    %v1965 = vadd.f32 %v1933, %v1950
    %v1966 = vadd.f32 %v1934, %v1955
    %v1967 = vadd.f32 %v1935, %v1955
    %v1968 = vadd.f32 %v1936, %v1955
    %v1969 = vmax.f32 %v1957, 0.0
    %v1970 = vmax.f32 %v1958, 0.0
    %v1971 = vmax.f32 %v1959, 0.0
    %v1972 = vmax.f32 %v1960, 0.0
    %v1973 = vmax.f32 %v1961, 0.0
    %v1974 = vmax.f32 %v1962, 0.0
    %v1975 = vmax.f32 %v1963, 0.0
    %v1976 = vmax.f32 %v1964, 0.0
    %v1977 = vmax.f32 %v1965, 0.0
    %v1978 = vmax.f32 %v1966, 0.0
    %v1979 = vmax.f32 %v1967, 0.0
    %v1980 = vmax.f32 %v1968, 0.0
    %1981 = vst [vmem:[#allocation3] sm:$0xff] %v1969
    %1982 = vst [vmem:[#allocation3 + $0x8] sm:$0xff] %v1970
    %1983 = vst.msk [vmem:[#allocation3 + $0x10] sm:$0xff] %vm23, %v1971
    %1984 = vst [vmem:[#allocation3 + $0x18] sm:$0xff] %v1972
    %1985 = vst [vmem:[#allocation3 + $0x20] sm:$0xff] %v1973
    %1986 = vst.msk [vmem:[#allocation3 + $0x28] sm:$0xff] %vm23, %v1974
    %1987 = vst [vmem:[#allocation3 + $0x30] sm:$0xff] %v1975
    %1988 = vst [vmem:[#allocation3 + $0x38] sm:$0xff] %v1976
    %1989 = vst.msk [vmem:[#allocation3 + $0x40] sm:$0xff] %vm23, %v1977
    %1990 = vst [vmem:[#allocation3 + $0x48] sm:$0xff] %v1978
    %1991 = vst [vmem:[#allocation3 + $0x50] sm:$0xff] %v1979
    %1992 = vst.msk [vmem:[#allocation3 + $0x58] sm:$0xff] %vm23, %v1980
    %v1993 = vmul.f32 %v1553, %v1908
    %v1994 = vmul.f32 %v1555, %v1908
    %v1995 = vmul.f32 %v1642, %v1908
    %v1996 = vmul.f32 %v1559, %v1913
    %v1997 = vmul.f32 %v1561, %v1913
    %v1998 = vmul.f32 %v1647, %v1913
    %v1999 = vmul.f32 %v1565, %v1918
    %v2000 = vmul.f32 %v1567, %v1918
    %v2001 = vmul.f32 %v1652, %v1918
    %v2002 = vmul.f32 %v1571, %v1923
    %v2003 = vmul.f32 %v1573, %v1923
    %v2004 = vmul.f32 %v1657, %v1923
    %v2005 = vadd.f32 %v1993, %v1940
    %v2006 = vadd.f32 %v1994, %v1940
    %v2007 = vadd.f32 %v1995, %v1940
    %v2008 = vadd.f32 %v1996, %v1945
    %v2009 = vadd.f32 %v1997, %v1945
    %v2010 = vadd.f32 %v1998, %v1945
    %v2011 = vadd.f32 %v1999, %v1950
    %v2012 = vadd.f32 %v2000, %v1950
    %v2013 = vadd.f32 %v2001, %v1950
    %v2014 = vadd.f32 %v2002, %v1955
    %v2015 = vadd.f32 %v2003, %v1955
    %v2016 = vadd.f32 %v2004, %v1955
    %v2017 = vmax.f32 %v2005, 0.0
    %v2018 = vmax.f32 %v2006, 0.0
    %v2019 = vmax.f32 %v2007, 0.0
    %v2020 = vmax.f32 %v2008, 0.0
    %v2021 = vmax.f32 %v2009, 0.0
    %v2022 = vmax.f32 %v2010, 0.0
    %v2023 = vmax.f32 %v2011, 0.0
    %v2024 = vmax.f32 %v2012, 0.0
    %v2025 = vmax.f32 %v2013, 0.0
    %v2026 = vmax.f32 %v2014, 0.0
    %v2027 = vmax.f32 %v2015, 0.0
    %v2028 = vmax.f32 %v2016, 0.0
    %s2029 = scalar_lea.vmem [#allocation3], 96
    %2030 = vst [vmem:[%s2029] sm:$0xff] %v2017
    %2031 = vst [vmem:[%s2029 + $0x8] sm:$0xff] %v2018
    %2032 = vst.msk [vmem:[%s2029 + $0x10] sm:$0xff] %vm23, %v2019
    %2033 = vst [vmem:[%s2029 + $0x18] sm:$0xff] %v2020
    %2034 = vst [vmem:[%s2029 + $0x20] sm:$0xff] %v2021
    %2035 = vst.msk [vmem:[%s2029 + $0x28] sm:$0xff] %vm23, %v2022
    %2036 = vst [vmem:[%s2029 + $0x30] sm:$0xff] %v2023
    %2037 = vst [vmem:[%s2029 + $0x38] sm:$0xff] %v2024
    %2038 = vst.msk [vmem:[%s2029 + $0x40] sm:$0xff] %vm23, %v2025
    %2039 = vst [vmem:[%s2029 + $0x48] sm:$0xff] %v2026
    %2040 = vst [vmem:[%s2029 + $0x50] sm:$0xff] %v2027
    %2041 = vst.msk [vmem:[%s2029 + $0x58] sm:$0xff] %vm23, %v2028
    // Predicated region
    $region22: #{tpu_custom_call.1} parent=1 // pred_check
      _
    $region23: #{tpu_custom_call.1} parent=1 // pred_check_branch
      %2043 = sbr.rel (0) target = $region25
    $region24: #{tpu_custom_call.1} parent=1 // pred_region
      %s2045 = ssub.s32 3072, 3072
      %2046 = vsyncadd [#allocation4], %s2045
      %s2047 = sshll.u32 [#allocation3], 4
      %s2048 = int_to_ptr.vmem [resolvable:$true] %s2047
      %2053 = dma.vmem_to_hbm [thread:$0]  %s2048, 3072, %s5, [#allocation4], 384, 384, 24
    $region25: #{tpu_custom_call.1} parent=1 // pred_fallthru
      _
    // Predicated region
    $region26: #{tpu_custom_call.1} parent=1 // pred_check
      _
    $region27: #{tpu_custom_call.1} parent=1 // pred_check_branch
      %2055 = sbr.rel (0) target = $region29
    $region28: #{tpu_custom_call.1} parent=1 // pred_region
      %2056 = dma.done [#allocation4], 3072
    $region29: #{tpu_custom_call.1} parent=1 // pred_fallthru
      _
    %2057 = vsyncpa [#allocation4], 1

</llo_original>
